<compile_context>
chip_gen: v5e
topology: v5e:2x2
jax: 0.10.0
libtpu: 0.0.40
codegen_flags: <defaults>
</compile_context>

<pallas_src>
import math
from functools import partial

import jax
import jax.numpy as jnp
from jax import lax
from jax.experimental import pallas as pl
from jax.experimental.pallas import tpu as pltpu


def _vmem_limit_bytes():
    # ~75% of physical VMEM (headroom for double-buffered BlockSpec tiles + scratch).
    try:
        cap = int(pltpu.get_tpu_info().vmem_capacity_bytes)
    except Exception:
        cap = 64 * 1024 * 1024
    return max(32 * 1024 * 1024, (cap * 3) // 4)


# --------------------------------------------------------------------------------------
# Pallas kernel: phase-grid transposed convolution (stride 4, kernel 8) + fused epilogue
# --------------------------------------------------------------------------------------
def _deconv_phase_kernel(x_ref, w_ref, b_ref, s_ref, o_ref, *, tq, wq_pad, fuse_affine):
    """One (batch, q-row-block) grid step.

    x_ref: (1, Hp, Wp, CI)        zero-padded, UN-dilated input (full spatial extent)
    w_ref: (4*CI, 16*CO)          tap-concatenated phase weights (K = 4*CI)
    b_ref: (1, 16*CO)             ConvTranspose bias tiled over the 16 phases (f32)
    s_ref: (2,) SMEM              fused 1x1-conv epilogue scalars (scale, shift)
    o_ref: (1, tq, wq_pad, 16*CO) phase-grid output rows [q0, q0 + tq)
    """
    ci = x_ref.shape[-1]
    n = o_ref.shape[-1]
    q0 = pl.multiple_of(pl.program_id(1) * tq, tq)

    # Single (tq+1)-row window load; rows are shared by the two jh taps.
    # Kept in f32 in-kernel for robust layouts; HBM storage may still be bf16.
    win = x_ref[0, pl.ds(q0, tq + 1), :, :].astype(jnp.float32)     # (tq+1, Wp, CI)
    winl = win[:, 0:wq_pad, :]                                      # jw = 0 columns
    winr = win[:, 1:wq_pad + 1, :]                                  # jw = 1 columns

    # Tap-concatenated operand: K = 4*CI, M = tq*wq_pad.
    # Tap order = (jh, jw) = (0,0),(0,1),(1,0),(1,1) -> matches w_cat row blocks.
    xcat = jnp.concatenate(
        [winl[0:tq], winr[0:tq], winl[1:tq + 1], winr[1:tq + 1]], axis=-1)
    xcat = xcat.reshape(tq * wq_pad, 4 * ci)        # layout-free (wq_pad % 8 == 0)

    acc = jnp.dot(xcat, w_ref[...], preferred_element_type=jnp.float32)   # (M, 16*CO)
    y = jnp.maximum(acc + b_ref[...], 0.0)          # ConvTranspose bias + ReLU
    if fuse_affine:                                  # fused Conv2d(1,1,1,1) + ReLU
        y = jnp.maximum(y * s_ref[0] + s_ref[1], 0.0)
    o_ref[...] = y.reshape(1, tq, wq_pad, n).astype(o_ref.dtype)


# --------------------------------------------------------------------------------------
# Wrapper: ConvTranspose2d(stride=4, k=8) + ReLU (+ optional fused 1x1 conv + ReLU),
# returned as an uncropped sub-pixel phase grid (B, hq_pad, wq_pad, 16*CO).
# --------------------------------------------------------------------------------------
def _phase_grid_deconv(x_nhwc, wt, bias, *, affine=None, tq=8, out_dtype=jnp.float32):
    b, h_in, w_in, ci = x_nhwc.shape
    ci_w, co, kh, kw = wt.shape
    assert ci_w == ci and kh == 8 and kw == 8
    hq, wq = h_in + 1, w_in + 1                         # phase-grid extents
    wq_pad = -(-wq // 8) * 8                            # sublane-aligned M tiling
    # Keep the f32 accumulator block modest (<= ~128 KiB) to avoid vreg/VMEM spills.
    tq = max(1, min(tq, hq, (128 * 1024) // max(1, wq_pad * 16 * co * 4)))
    nqb = -(-hq // tq)
    hq_pad = nqb * tq
    hp, wp = hq_pad + 1, wq_pad + 1

    # Zero pad: 1 row/col on top/left; right/bottom so every (tq+1, wp) window is in-bounds.
    xpad = jnp.pad(x_nhwc, ((0, 0), (1, hp - 1 - h_in), (1, wp - 1 - w_in), (0, 0)))

    # Tap-concatenated phase weights:
    #   w_cat[(jh*2+jw)*CI + ci, (rh*4+rw)*CO + co] = wt[ci, co, rh + 4*(1-jh), rw + 4*(1-jw)]
    w6 = wt.astype(jnp.float32).reshape(ci, co, 2, 4, 2, 4)[:, :, ::-1, :, ::-1, :]
    w_cat = jnp.transpose(w6, (2, 4, 0, 3, 5, 1)).reshape(4 * ci, 16 * co)
    b_phase = jnp.tile(bias.astype(jnp.float32).reshape(1, co), (1, 16))     # (1, 16*CO)

    if affine is None:
        fuse, epi = False, jnp.zeros((2,), jnp.float32)
    else:
        fuse = True
        epi = jnp.stack([jnp.asarray(affine[0], jnp.float32).reshape(()),
                         jnp.asarray(affine[1], jnp.float32).reshape(())])   # (2,) SMEM

    kernel = partial(_deconv_phase_kernel, tq=tq, wq_pad=wq_pad, fuse_affine=fuse)
    yphase = pl.pallas_call(
        kernel,
        out_shape=jax.ShapeDtypeStruct((b, hq_pad, wq_pad, 16 * co), out_dtype),
        grid=(b, nqb),
        in_specs=[
            # TODO(synk): for very large images on v7x, tile this spec over q-rows
            # (halo via a second +1-shifted BlockSpec) so residency does not scale with H*W.
            pl.BlockSpec((1, hp, wp, ci), lambda nb, qb: (nb, 0, 0, 0)),
            pl.BlockSpec((4 * ci, 16 * co), lambda nb, qb: (0, 0)),
            pl.BlockSpec((1, 16 * co), lambda nb, qb: (0, 0)),
            pl.BlockSpec(memory_space=pltpu.MemorySpace.SMEM),
        ],
        out_specs=pl.BlockSpec((1, tq, wq_pad, 16 * co), lambda nb, qb: (nb, qb, 0, 0)),
        compiler_params=pltpu.CompilerParams(
            dimension_semantics=("parallel", "parallel"),
            vmem_limit_bytes=_vmem_limit_bytes()),
    )(xpad, w_cat, b_phase, epi)
    return yphase, hq, wq


def _pixel_shuffle_crop(yphase, hq, wq, co, crop, oh, ow):
    """Interleave the 16 sub-pixel phases and crop.  Pure layout -> XLA glue, done in the
    phase grid's (possibly bf16) dtype so it is a single cheap pass."""
    b = yphase.shape[0]
    y = yphase[:, :hq, :wq].reshape(b, hq, wq, 4, 4, co)
    y = jnp.transpose(y, (0, 1, 3, 2, 4, 5)).reshape(b, 4 * hq, 4 * wq, co)
    return y[:, crop:crop + oh, crop:crop + ow, :]


def _decoder_img_forward(inputs, params, *, intermediate_dtype):
    """inputs: (batch, seq, embed) with seq = hw*hw.  Returns NCHW like the PyTorch module."""
    b, s, e = inputs.shape
    hw = int(math.isqrt(s))
    x = inputs.reshape(b, hw, hw, e).astype(jnp.float32)       # NHWC view of the NCHW input

    # Layer 1: ConvTranspose2d(e -> c_hid, s=4, k=8, p=0, op=0) + ReLU.
    c_hid = params["wt1"].shape[1]
    yp1, hq1, wq1 = _phase_grid_deconv(x, params["wt1"], params["b1"],
                                       tq=8, out_dtype=intermediate_dtype)
    oh1 = 4 * hw + 4
    y1 = _pixel_shuffle_crop(yp1, hq1, wq1, c_hid, 0, oh1, oh1)   # bf16 intermediate

    # Layer 2: ConvTranspose2d(c_hid -> c_out, s=4, k=8, p=3, op=1) + ReLU,
    #          with Conv2d(1,1,1,1) + ReLU fused into the epilogue (1->1 channel only).
    assert params["wt2"].shape[1] == 1 and params["w3"].size == 1, \
        "fused 1x1-conv epilogue assumes the final Conv2d is 1->1 channel"
    c_out = params["wt2"].shape[1]
    yp2, hq2, wq2 = _phase_grid_deconv(y1, params["wt2"], params["b2"],
                                       affine=(params["w3"], params["b3"]),
                                       tq=8, out_dtype=jnp.float32)
    oh2 = 4 * oh1 - 1                                   # (oh1-1)*4 - 2*3 + 8 + 1
    y2 = _pixel_shuffle_crop(yp2, hq2, wq2, c_out, 3, oh2, oh2)
    return jnp.transpose(y2, (0, 3, 1, 2))              # NCHW, f32


decoder_img_forward = jax.jit(partial(_decoder_img_forward, intermediate_dtype=jnp.bfloat16))
decoder_img_forward_f32 = jax.jit(partial(_decoder_img_forward, intermediate_dtype=jnp.float32))


# --------------------------------------------------------------------------------------
# Pure-JAX reference (for self-check)
# --------------------------------------------------------------------------------------
def decoder_img_reference(inputs, params):
    b, s, e = inputs.shape
    hw = int(math.isqrt(s))
    x = jnp.transpose(inputs.reshape(b, hw, hw, e), (0, 3, 1, 2)).astype(jnp.float32)

    def convt(x, wt, bias, stride, pad, opad):
        ci, co, kh, kw = wt.shape
        rhs = jnp.transpose(wt[:, :, ::-1, ::-1], (1, 0, 2, 3))      # (CO, CI, KH, KW)
        lo = kh - 1 - pad
        hi = lo + opad
        y = lax.conv_general_dilated(
            x, rhs, window_strides=(1, 1),
            padding=[(lo, hi), (lo, hi)], lhs_dilation=(stride, stride),
            dimension_numbers=("NCHW", "OIHW", "NCHW"),
            precision=lax.Precision.HIGHEST)
        return jax.nn.relu(y + bias[None, :, None, None])

    y = convt(x, params["wt1"], params["b1"], 4, 0, 0)
    y = convt(y, params["wt2"], params["b2"], 4, 3, 1)
    y = jax.nn.relu(y * params["w3"].reshape(()) + params["b3"].reshape(()))
    return y


# --------------------------------------------------------------------------------------
if __name__ == "__main__":
    key = jax.random.PRNGKey(0)
    ks = jax.random.split(key, 7)

    # Small shapes consistent with the forward pass: seq = hw*hw, embed = input_channel.
    B, hw = 2, 4
    C_IN, C_HID, C_OUT, K = 32, 8, 1, 8

    inputs = jax.random.normal(ks[0], (B, hw * hw, C_IN), jnp.float32)
    params = {
        # PyTorch layouts: ConvTranspose2d weight (CI, CO, KH, KW); Conv2d weight (CO, CI, 1, 1)
        "wt1": jax.random.normal(ks[1], (C_IN, C_HID, K, K), jnp.float32) * 0.05,
        "b1":  jax.random.normal(ks[2], (C_HID,), jnp.float32) * 0.05,
        "wt2": jax.random.normal(ks[3], (C_HID, C_OUT, K, K), jnp.float32) * 0.05,
        "b2":  jax.random.normal(ks[4], (C_OUT,), jnp.float32) * 0.05,
        "w3":  jax.random.normal(ks[5], (1, 1, 1, 1), jnp.float32) * 0.5,
        "b3":  jax.random.normal(ks[6], (1,), jnp.float32) * 0.05,
    }

    ref = jax.block_until_ready(decoder_img_reference(inputs, params))
    expected_hw = 16 * hw + 15   # ((4hw+4)-1)*4 - 2*3 + 8 + 1

    # f32-intermediate path: tight check of the kernel math.
    out_f32 = jax.block_until_ready(decoder_img_forward_f32(inputs, params))
    assert out_f32.shape == (B, C_OUT, expected_hw, expected_hw), out_f32.shape
    err32 = float(jnp.max(jnp.abs(out_f32 - ref)))
    assert err32 < 2e-3, f"f32 path max abs error {err32}"

    # bf16-intermediate path (production config): looser tolerance for bf16 rounding.
    out_bf16 = jax.block_until_ready(decoder_img_forward(inputs, params))
    assert out_bf16.shape == (B, C_OUT, expected_hw, expected_hw), out_bf16.shape
    errbf = float(jnp.max(jnp.abs(out_bf16 - ref)))
    assert errbf < 2e-2, f"bf16-intermediate path max abs error {errbf}"

    print("KERNEL_OK")
</pallas_src>

<mosaic_0001>
module attributes {stable_mosaic.version = 11 : i64} {
  func.func @_deconv_phase_kernel(%arg0: i32, %arg1: i32, %arg2: memref<1x6x9x32xf32, #tpu.memory_space<vmem>>, %arg3: memref<128x128xf32, #tpu.memory_space<vmem>>, %arg4: memref<1x128xf32, #tpu.memory_space<vmem>>, %arg5: memref<2xf32, #tpu.memory_space<smem>>, %arg6: memref<1x5x8x128xf32, #tpu.memory_space<vmem>>) attributes {dimension_semantics = [#tpu.dimension_semantics<parallel>, #tpu.dimension_semantics<parallel>], iteration_bounds = array<i64: 2, 1>, scalar_prefetch = 0 : i64, scratch_operands = 0 : i64, tpu.core_type = #tpu.core_type<tc>, window_params = [{transform_indices = @transform_0, window_bounds = array<i64: 1, 6, 9, 32>}, {pipeline_mode = #tpu.pipeline_mode<synchronous>, transform_indices = @transform_1, window_bounds = array<i64: 128, 128>}, {pipeline_mode = #tpu.pipeline_mode<synchronous>, transform_indices = @transform_2, window_bounds = array<i64: 1, 128>}, {transform_indices = @transform_3, window_bounds = array<i64: 2>}, {transform_indices = @transform_4, window_bounds = array<i64: 1, 5, 8, 128>}]} {
    %c5_i32 = arith.constant 5 : i32
    %0 = arith.muli %arg1, %c5_i32 : i32
    %1 = tpu.assume_multiple %0, 5 : i32
    %c0 = arith.constant 0 : index
    %2 = arith.index_cast %1 : i32 to index
    %c0_0 = arith.constant 0 : index
    %c0_1 = arith.constant 0 : index
    %3 = vector.load %arg2[%c0, %2, %c0_0, %c0_1] : memref<1x6x9x32xf32, #tpu.memory_space<vmem>>, vector<1x6x9x32xf32>
    %4 = vector.shape_cast %3 : vector<1x6x9x32xf32> to vector<6x9x32xf32>
    %5 = vector.extract_strided_slice %4 {offsets = [0, 0, 0], sizes = [6, 8, 32], strides = [1, 1, 1]} : vector<6x9x32xf32> to vector<6x8x32xf32>
    %6 = vector.extract_strided_slice %4 {offsets = [0, 1, 0], sizes = [6, 8, 32], strides = [1, 1, 1]} : vector<6x9x32xf32> to vector<6x8x32xf32>
    %7 = vector.extract_strided_slice %5 {offsets = [0, 0, 0], sizes = [5, 8, 32], strides = [1, 1, 1]} : vector<6x8x32xf32> to vector<5x8x32xf32>
    %8 = vector.extract_strided_slice %6 {offsets = [0, 0, 0], sizes = [5, 8, 32], strides = [1, 1, 1]} : vector<6x8x32xf32> to vector<5x8x32xf32>
    %9 = vector.extract_strided_slice %5 {offsets = [1, 0, 0], sizes = [5, 8, 32], strides = [1, 1, 1]} : vector<6x8x32xf32> to vector<5x8x32xf32>
    %10 = vector.extract_strided_slice %6 {offsets = [1, 0, 0], sizes = [5, 8, 32], strides = [1, 1, 1]} : vector<6x8x32xf32> to vector<5x8x32xf32>
    %11 = tpu.concatenate %7, %8, %9, %10 in 2 : vector<5x8x32xf32>, vector<5x8x32xf32>, vector<5x8x32xf32>, vector<5x8x32xf32> -> vector<5x8x128xf32>
    %12 = vector.shape_cast %11 : vector<5x8x128xf32> to vector<40x128xf32>
    %c0_2 = arith.constant 0 : index
    %c0_3 = arith.constant 0 : index
    %13 = vector.load %arg3[%c0_2, %c0_3] : memref<128x128xf32, #tpu.memory_space<vmem>>, vector<128x128xf32>
    %cst = arith.constant dense<0.000000e+00> : vector<40x128xf32>
    %14 = tpu.matmul %12, %13, %cst {dimension_numbers = #tpu.dot_dimension_numbers<[1], [0], [0], [1], [0, 0, 1, 1], [], []>} : vector<40x128xf32>, vector<128x128xf32>, vector<40x128xf32> -> vector<40x128xf32>
    %c0_4 = arith.constant 0 : index
    %c0_5 = arith.constant 0 : index
    %15 = vector.load %arg4[%c0_4, %c0_5] : memref<1x128xf32, #tpu.memory_space<vmem>>, vector<1x128xf32>
    %16 = vector.broadcast %15 : vector<1x128xf32> to vector<40x128xf32>
    %17 = arith.addf %14, %16 : vector<40x128xf32>
    %cst_6 = arith.constant 0.000000e+00 : f32
    %18 = vector.broadcast %cst_6 : f32 to vector<40x128xf32>
    %19 = arith.maximumf %17, %18 : vector<40x128xf32>
    %20 = vector.shape_cast %19 : vector<40x128xf32> to vector<1x5x8x128xf32>
    %c0_7 = arith.constant 0 : index
    %c0_8 = arith.constant 0 : index
    %c0_9 = arith.constant 0 : index
    %c0_10 = arith.constant 0 : index
    %21 = vector.load %arg6[%c0_7, %c0_8, %c0_9, %c0_10] : memref<1x5x8x128xf32, #tpu.memory_space<vmem>>, vector<1x5x8x128xf32>
    tpu.vector_store %arg6[%c0_7, %c0_8, %c0_9, %c0_10], %20 {strides = array<i32>} : memref<1x5x8x128xf32, #tpu.memory_space<vmem>>, vector<1x5x8x128xf32>,
    return
  }
  func.func @transform_0(%arg0: i32, %arg1: i32) -> (i32, i32, i32, i32) {
    %c0_i32 = arith.constant 0 : i32
    %c0_i32_0 = arith.constant 0 : i32
    %c0_i32_1 = arith.constant 0 : i32
    %c0_i32_2 = arith.constant 0 : i32
    return %arg0, %c0_i32, %c0_i32_0, %c0_i32_1 : i32, i32, i32, i32
  }
  func.func @transform_1(%arg0: i32, %arg1: i32) -> (i32, i32) {
    %c0_i32 = arith.constant 0 : i32
    %c0_i32_0 = arith.constant 0 : i32
    %c0_i32_1 = arith.constant 0 : i32
    return %c0_i32, %c0_i32_0 : i32, i32
  }
  func.func @transform_2(%arg0: i32, %arg1: i32) -> (i32, i32) {
    %c0_i32 = arith.constant 0 : i32
    %c0_i32_0 = arith.constant 0 : i32
    %c0_i32_1 = arith.constant 0 : i32
    return %c0_i32, %c0_i32_0 : i32, i32
  }
  func.func @transform_3(%arg0: i32, %arg1: i32) -> i32 {
    %c0_i32 = arith.constant 0 : i32
    %c0_i32_0 = arith.constant 0 : i32
    return %c0_i32 : i32
  }
  func.func @transform_4(%arg0: i32, %arg1: i32) -> (i32, i32, i32, i32) {
    %c0_i32 = arith.constant 0 : i32
    %c0_i32_0 = arith.constant 0 : i32
    %c0_i32_1 = arith.constant 0 : i32
    return %arg0, %arg1, %c0_i32, %c0_i32_0 : i32, i32, i32, i32
  }
}

module attributes {stable_mosaic.version = 11 : i64} {
  func.func @_deconv_phase_kernel(%arg0: i32, %arg1: i32, %arg2: memref<1x25x25x8xf32, #tpu.memory_space<vmem>>, %arg3: memref<32x16xf32, #tpu.memory_space<vmem>>, %arg4: memref<1x16xf32, #tpu.memory_space<vmem>>, %arg5: memref<2xf32, #tpu.memory_space<smem>>, %arg6: memref<1x8x24x16xf32, #tpu.memory_space<vmem>>) attributes {dimension_semantics = [#tpu.dimension_semantics<parallel>, #tpu.dimension_semantics<parallel>], iteration_bounds = array<i64: 2, 3>, scalar_prefetch = 0 : i64, scratch_operands = 0 : i64, tpu.core_type = #tpu.core_type<tc>, window_params = [{transform_indices = @transform_0, window_bounds = array<i64: 1, 25, 25, 8>}, {pipeline_mode = #tpu.pipeline_mode<synchronous>, transform_indices = @transform_1, window_bounds = array<i64: 32, 16>}, {pipeline_mode = #tpu.pipeline_mode<synchronous>, transform_indices = @transform_2, window_bounds = array<i64: 1, 16>}, {transform_indices = @transform_3, window_bounds = array<i64: 2>}, {transform_indices = @transform_4, window_bounds = array<i64: 1, 8, 24, 16>}]} {
    %c8_i32 = arith.constant 8 : i32
    %0 = arith.muli %arg1, %c8_i32 : i32
    %1 = tpu.assume_multiple %0, 8 : i32
    %c0 = arith.constant 0 : index
    %2 = arith.index_cast %1 : i32 to index
    %c0_0 = arith.constant 0 : index
    %c0_1 = arith.constant 0 : index
    %3 = vector.load %arg2[%c0, %2, %c0_0, %c0_1] : memref<1x25x25x8xf32, #tpu.memory_space<vmem>>, vector<1x9x25x8xf32>
    %4 = vector.shape_cast %3 : vector<1x9x25x8xf32> to vector<9x25x8xf32>
    %5 = vector.extract_strided_slice %4 {offsets = [0, 0, 0], sizes = [9, 24, 8], strides = [1, 1, 1]} : vector<9x25x8xf32> to vector<9x24x8xf32>
    %6 = vector.extract_strided_slice %4 {offsets = [0, 1, 0], sizes = [9, 24, 8], strides = [1, 1, 1]} : vector<9x25x8xf32> to vector<9x24x8xf32>
    %7 = vector.extract_strided_slice %5 {offsets = [0, 0, 0], sizes = [8, 24, 8], strides = [1, 1, 1]} : vector<9x24x8xf32> to vector<8x24x8xf32>
    %8 = vector.extract_strided_slice %6 {offsets = [0, 0, 0], sizes = [8, 24, 8], strides = [1, 1, 1]} : vector<9x24x8xf32> to vector<8x24x8xf32>
    %9 = vector.extract_strided_slice %5 {offsets = [1, 0, 0], sizes = [8, 24, 8], strides = [1, 1, 1]} : vector<9x24x8xf32> to vector<8x24x8xf32>
    %10 = vector.extract_strided_slice %6 {offsets = [1, 0, 0], sizes = [8, 24, 8], strides = [1, 1, 1]} : vector<9x24x8xf32> to vector<8x24x8xf32>
    %11 = tpu.concatenate %7, %8, %9, %10 in 2 : vector<8x24x8xf32>, vector<8x24x8xf32>, vector<8x24x8xf32>, vector<8x24x8xf32> -> vector<8x24x32xf32>
    %12 = vector.shape_cast %11 : vector<8x24x32xf32> to vector<192x32xf32>
    %c0_2 = arith.constant 0 : index
    %c0_3 = arith.constant 0 : index
    %13 = vector.load %arg3[%c0_2, %c0_3] : memref<32x16xf32, #tpu.memory_space<vmem>>, vector<32x16xf32>
    %cst = arith.constant dense<0.000000e+00> : vector<192x16xf32>
    %14 = tpu.matmul %12, %13, %cst {dimension_numbers = #tpu.dot_dimension_numbers<[1], [0], [0], [1], [0, 0, 1, 1], [], []>} : vector<192x32xf32>, vector<32x16xf32>, vector<192x16xf32> -> vector<192x16xf32>
    %c0_4 = arith.constant 0 : index
    %c0_5 = arith.constant 0 : index
    %15 = vector.load %arg4[%c0_4, %c0_5] : memref<1x16xf32, #tpu.memory_space<vmem>>, vector<1x16xf32>
    %16 = vector.broadcast %15 : vector<1x16xf32> to vector<192x16xf32>
    %17 = arith.addf %14, %16 : vector<192x16xf32>
    %cst_6 = arith.constant 0.000000e+00 : f32
    %18 = vector.broadcast %cst_6 : f32 to vector<192x16xf32>
    %19 = arith.maximumf %17, %18 : vector<192x16xf32>
    %c0_7 = arith.constant 0 : index
    %20 = memref.load %arg5[%c0_7] : memref<2xf32, #tpu.memory_space<smem>>
    %21 = vector.broadcast %20 : f32 to vector<192x16xf32>
    %22 = arith.mulf %19, %21 : vector<192x16xf32>
    %c1 = arith.constant 1 : index
    %23 = memref.load %arg5[%c1] : memref<2xf32, #tpu.memory_space<smem>>
    %24 = vector.broadcast %23 : f32 to vector<192x16xf32>
    %25 = arith.addf %22, %24 : vector<192x16xf32>
    %cst_8 = arith.constant 0.000000e+00 : f32
    %26 = vector.broadcast %cst_8 : f32 to vector<192x16xf32>
    %27 = arith.maximumf %25, %26 : vector<192x16xf32>
    %28 = vector.shape_cast %27 : vector<192x16xf32> to vector<1x8x24x16xf32>
    %c0_9 = arith.constant 0 : index
    %c0_10 = arith.constant 0 : index
    %c0_11 = arith.constant 0 : index
    %c0_12 = arith.constant 0 : index
    %29 = vector.load %arg6[%c0_9, %c0_10, %c0_11, %c0_12] : memref<1x8x24x16xf32, #tpu.memory_space<vmem>>, vector<1x8x24x16xf32>
    tpu.vector_store %arg6[%c0_9, %c0_10, %c0_11, %c0_12], %28 {strides = array<i32>} : memref<1x8x24x16xf32, #tpu.memory_space<vmem>>, vector<1x8x24x16xf32>,
    return
  }
  func.func @transform_0(%arg0: i32, %arg1: i32) -> (i32, i32, i32, i32) {
    %c0_i32 = arith.constant 0 : i32
    %c0_i32_0 = arith.constant 0 : i32
    %c0_i32_1 = arith.constant 0 : i32
    %c0_i32_2 = arith.constant 0 : i32
    return %arg0, %c0_i32, %c0_i32_0, %c0_i32_1 : i32, i32, i32, i32
  }
  func.func @transform_1(%arg0: i32, %arg1: i32) -> (i32, i32) {
    %c0_i32 = arith.constant 0 : i32
    %c0_i32_0 = arith.constant 0 : i32
    %c0_i32_1 = arith.constant 0 : i32
    return %c0_i32, %c0_i32_0 : i32, i32
  }
  func.func @transform_2(%arg0: i32, %arg1: i32) -> (i32, i32) {
    %c0_i32 = arith.constant 0 : i32
    %c0_i32_0 = arith.constant 0 : i32
    %c0_i32_1 = arith.constant 0 : i32
    return %c0_i32, %c0_i32_0 : i32, i32
  }
  func.func @transform_3(%arg0: i32, %arg1: i32) -> i32 {
    %c0_i32 = arith.constant 0 : i32
    %c0_i32_0 = arith.constant 0 : i32
    return %c0_i32 : i32
  }
  func.func @transform_4(%arg0: i32, %arg1: i32) -> (i32, i32, i32, i32) {
    %c0_i32 = arith.constant 0 : i32
    %c0_i32_0 = arith.constant 0 : i32
    %c0_i32_1 = arith.constant 0 : i32
    return %arg0, %arg1, %c0_i32, %c0_i32_0 : i32, i32, i32, i32
  }
}

</mosaic_0001>

<llo_original>
// kernel: _decoder_img_forward.2
$region0: #{_decoder_img_forward.2}
  #allocation0 [shape = 'u32[]', space=smem, size = 0x4, offset = 0x4, fixed_abs, tag = 'smem constant byte address 0x4 - core index']
  #allocation1 [shape = 'u32[72,128]{1,0:T(1,128)}', space=vmem, size = 0x9000, scoped, tag = 'internal scratch']
  %s0 = inlined_call_operand.vmem [shape: f32[2,6,9,32], index: 0, kind: input, shape index: {}]
  %s1 = inlined_call_operand.vmem [shape: f32[128,128], index: 1, kind: input, shape index: {}]
  %s2 = inlined_call_operand.vmem [shape: f32[1,128], index: 2, kind: input, shape index: {}]
  %s3 = inlined_call_operand.vmem [shape: f32[2], index: 3, kind: input, shape index: {}]
  %s4 = inlined_call_operand.vmem [shape: f32[2,5,8,128], index: 4, kind: output, shape index: {}]
  %s5 = sld [smem:[#allocation0]]
  $region53: #{_decoder_img_forward.2} parent=0
    _
  %s7 = ssub.s32 1, %s5
  %s8 = scalar_select 0, %s7, %s5
  $region1: #{_decoder_img_forward.2} parent=0
    #allocation2 [shape = 'u8[512]{0}', space=smem, size = 0x200, scoped, tag = 'input window, operand 3, single buffered']
    #allocation3 [shape = 's32[2]{0}', space=sflag, size = 0x8, scoped, tag = 'scoped memory for _decoder_img_forward.2']
    %9 = vsyncpa [#allocation3], 0
    loop: start=0, step=1, limit=4
    $region2: #{_decoder_img_forward.2} parent=1 // loop_pre_header
      _
    $region3: #{_decoder_img_forward.2} parent=1 // loop_header
      %s11 = sphi 0, %s15
      %p12 = scmp.ge.s32.totalorder %s11, 4
      %s18 = sphi 0, %s30
      %s19 = sphi 0, %s26
      %s20 = sphi 0, %s18
      %s21 = sphi 0, %s19
      %s22 = sphi 0, %s20
      %s23 = sphi 0, %s21
      %s33 = sphi 0, %s35
      %s36 = sphi 0, %s33
      %s37 = sphi 0, %s36
      %s53 = sphi 0, %s37
      %s57 = sphi 0, %s57
      %s59 = sphi 0, %s57
      %s60 = sphi 0, %s59
      %s74 = sphi 0, %s60
      %s78 = sphi 0, %s78
      %s80 = sphi 0, %s78
      %s81 = sphi 0, %s80
      %s95 = sphi 0, %s81
      %s99 = sphi 0, %s99
      %s101 = sphi 0, %s99
      %s102 = sphi 0, %s101
      %s116 = sphi 0, %s102
      %s124 = sphi 0, %s126
      %s127 = sphi 0, %s124
      %s128 = sphi 0, %s127
      %s144 = sphi 0, %s128
    $region4: #{_decoder_img_forward.2} parent=1 // loop_header_branch
      %14 = sbr.rel (%p12) target = $region8
    $region5: #{_decoder_img_forward.2} parent=1 // loop_body
      %s16 = ssub.s32 %s11, 1
      %s17 = ssub.s32 %s11, 2
      %s24 = sadd.s32 1, %s19
      %p25 = scmp.ge.s32.totalorder %s24, 1
      %s26 = scalar_select %p25, 0, %s24
      %s27 = sadd.s32 1, %s18
      %s28 = scalar_select %p25, %s27, %s18
      %p29 = scmp.ge.s32.totalorder %s28, 2
      %s30 = scalar_select %p29, 0, %s28
      %s31 = ssub.s32 %s18, %s30
      %p32 = scmp.eq.s32.totalorder %s31, 0
      %s34 = sadd.s32 %s33, 1
      %s35 = scalar_select %p32, %s33, %s34
      %p38 = pneg %p32
      %p39 = scmp.eq.s32.totalorder %s11, 1
      %p40 = por %p38, %p39
      %p41 = scmp.ne.s32.totalorder %s33, %s36
      %p42 = scmp.eq.s32.totalorder %s11, 0
      %p43 = por %p41, %p42
      %p44 = scmp.ne.s32.totalorder %s33, %s36
      %p45 = scmp.eq.s32.totalorder %s16, 1
      %p46 = por %p44, %p45
      %p47 = scmp.ne.s32.totalorder %s36, %s37
      %p48 = scmp.eq.s32.totalorder %s16, 0
      %p49 = por %p47, %p48
      %p50 = scmp.ne.s32.totalorder %s36, %s37
      %p51 = scmp.eq.s32.totalorder %s17, 1
      %p52 = por %p50, %p51
      %p54 = scmp.ne.s32.totalorder %s37, %s53
      %p55 = scmp.eq.s32.totalorder %s17, 0
      %p56 = por %p54, %p55
      %s58 = sadd.s32 %s57, 1
      %p61 = scmp.eq.s32.totalorder %s11, 1
      %p62 = scmp.ne.s32.totalorder %s57, %s59
      %p63 = scmp.eq.s32.totalorder %s11, 0
      %p64 = por %p62, %p63
      %p65 = scmp.ne.s32.totalorder %s57, %s59
      %p66 = scmp.eq.s32.totalorder %s16, 1
      %p67 = por %p65, %p66
      %p68 = scmp.ne.s32.totalorder %s59, %s60
      %p69 = scmp.eq.s32.totalorder %s16, 0
      %p70 = por %p68, %p69
      %p71 = scmp.ne.s32.totalorder %s59, %s60
      %p72 = scmp.eq.s32.totalorder %s17, 1
      %p73 = por %p71, %p72
      %p75 = scmp.ne.s32.totalorder %s60, %s74
      %p76 = scmp.eq.s32.totalorder %s17, 0
      %p77 = por %p75, %p76
      %s79 = sadd.s32 %s78, 1
      %p82 = scmp.eq.s32.totalorder %s11, 1
      %p83 = scmp.ne.s32.totalorder %s78, %s80
      %p84 = scmp.eq.s32.totalorder %s11, 0
      %p85 = por %p83, %p84
      %p86 = scmp.ne.s32.totalorder %s78, %s80
      %p87 = scmp.eq.s32.totalorder %s16, 1
      %p88 = por %p86, %p87
      %p89 = scmp.ne.s32.totalorder %s80, %s81
      %p90 = scmp.eq.s32.totalorder %s16, 0
      %p91 = por %p89, %p90
      %p92 = scmp.ne.s32.totalorder %s80, %s81
      %p93 = scmp.eq.s32.totalorder %s17, 1
      %p94 = por %p92, %p93
      %p96 = scmp.ne.s32.totalorder %s81, %s95
      %p97 = scmp.eq.s32.totalorder %s17, 0
      %p98 = por %p96, %p97
      %s100 = sadd.s32 %s99, 1
      %p103 = scmp.eq.s32.totalorder %s11, 1
      %p104 = scmp.ne.s32.totalorder %s99, %s101
      %p105 = scmp.eq.s32.totalorder %s11, 0
      %p106 = por %p104, %p105
      %p107 = scmp.ne.s32.totalorder %s99, %s101
      %p108 = scmp.eq.s32.totalorder %s16, 1
      %p109 = por %p107, %p108
      %p110 = scmp.ne.s32.totalorder %s101, %s102
      %p111 = scmp.eq.s32.totalorder %s16, 0
      %p112 = por %p110, %p111
      %p113 = scmp.ne.s32.totalorder %s101, %s102
      %p114 = scmp.eq.s32.totalorder %s17, 1
      %p115 = por %p113, %p114
      %p117 = scmp.ne.s32.totalorder %s102, %s116
      %p118 = scmp.eq.s32.totalorder %s17, 0
      %p119 = por %p117, %p118
      %s120 = ssub.s32 %s18, %s30
      %s121 = ssub.s32 %s19, %s26
      %s122 = sor.u32 %s120, %s121
      %p123 = scmp.eq.s32.totalorder %s122, 0
      %s125 = sadd.s32 %s124, 1
      %s126 = scalar_select %p123, %s124, %s125
      %p129 = pneg %p123
      %p130 = scmp.eq.s32.totalorder %s11, 1
      %p131 = por %p129, %p130
      %p132 = scmp.ne.s32.totalorder %s124, %s127
      %p133 = scmp.eq.s32.totalorder %s11, 0
      %p134 = por %p132, %p133
      %p135 = scmp.ne.s32.totalorder %s124, %s127
      %p136 = scmp.eq.s32.totalorder %s16, 1
      %p137 = por %p135, %p136
      %p138 = scmp.ne.s32.totalorder %s127, %s128
      %p139 = scmp.eq.s32.totalorder %s16, 0
      %p140 = por %p138, %p139
      %p141 = scmp.ne.s32.totalorder %s127, %s128
      %p142 = scmp.eq.s32.totalorder %s17, 1
      %p143 = por %p141, %p142
      %p145 = scmp.ne.s32.totalorder %s128, %s144
      %p146 = scmp.eq.s32.totalorder %s17, 0
      %p147 = por %p145, %p146
      %p148 = scmp.le.s32.totalorder 1, %s11
      %p149 = scmp.lt.s32.totalorder %s11, 3
      %p150 = pnand %p148, %p149
      %p151 = pneg %p150
      // Predicated region
      $region9: #{_decoder_img_forward.2} parent=5 // pred_check
        _
      $region10: #{_decoder_img_forward.2} parent=5 // pred_check_branch
        %153 = sbr.rel (%p150) target = $region12
      $region11: #{_decoder_img_forward.2} parent=5 // pred_region
        %s154 = ssub.s32 %s11, 1
        // Predicated region
        $region13: #{_decoder_img_forward.2} parent=11 // pred_check
          %p155 = pneg %p70
        $region14: #{_decoder_img_forward.2} parent=11 // pred_check_branch
          %157 = sbr.rel (%p155) target = $region16
        $region15: #{_decoder_img_forward.2} parent=11 // pred_region
          _
        $region16: #{_decoder_img_forward.2} parent=11 // pred_fallthru
          _
        // Predicated region
        $region17: #{_decoder_img_forward.2} parent=11 // pred_check
          %p158 = pneg %p91
        $region18: #{_decoder_img_forward.2} parent=11 // pred_check_branch
          %160 = sbr.rel (%p158) target = $region20
        $region19: #{_decoder_img_forward.2} parent=11 // pred_region
          _
        $region20: #{_decoder_img_forward.2} parent=11 // pred_fallthru
          _
        // Predicated region
        $region21: #{_decoder_img_forward.2} parent=11 // pred_check
          %p161 = pneg %p112
        $region22: #{_decoder_img_forward.2} parent=11 // pred_check_branch
          %163 = sbr.rel (%p161) target = $region24
        $region23: #{_decoder_img_forward.2} parent=11 // pred_region
          %165 = vsyncadd [#allocation3], 0
          %s167 = sshll.u32 %s3, 4
          %s168 = int_to_ptr.vmem [resolvable:$true] %s167
          %170 = dma.vmem_to_smem %s168, 16, [#allocation2], [#allocation3]
        $region24: #{_decoder_img_forward.2} parent=11 // pred_fallthru
          _
      $region12: #{_decoder_img_forward.2} parent=5 // pred_fallthru
        _
      %p171 = scmp.lt.s32.totalorder %s11, 2
      // Predicated region
      $region25: #{_decoder_img_forward.2} parent=5 // pred_check
        %p172 = pneg %p171
      $region26: #{_decoder_img_forward.2} parent=5 // pred_check_branch
        %174 = sbr.rel (%p172) target = $region28
      $region27: #{_decoder_img_forward.2} parent=5 // pred_region
        // Predicated region
        $region29: #{_decoder_img_forward.2} parent=27 // pred_check
          %p175 = pneg %p43
        $region30: #{_decoder_img_forward.2} parent=27 // pred_check_branch
          %177 = sbr.rel (%p175) target = $region32
        $region31: #{_decoder_img_forward.2} parent=27 // pred_region
          %p178 = scmp.lt.s32.totalorder %s18, 1
          %s179 = scalar_select %p178, %s18, 1
          %s180 = smul.addr %s179, 12
          %s181 = smul.addr %s180, 8
          %s182 = scalar_lea.vmem %s0, %s181
        $region32: #{_decoder_img_forward.2} parent=27 // pred_fallthru
          _
      $region28: #{_decoder_img_forward.2} parent=5 // pred_fallthru
        _
      %p183 = scmp.le.s32.totalorder 1, %s11
      %p184 = scmp.lt.s32.totalorder %s11, 3
      %p185 = pnand %p183, %p184
      %p186 = pneg %p185
      // Predicated region
      $region33: #{_decoder_img_forward.2} parent=5 // pred_check
        _
      $region34: #{_decoder_img_forward.2} parent=5 // pred_check_branch
        %188 = sbr.rel (%p185) target = $region36
      $region35: #{_decoder_img_forward.2} parent=5 // pred_region
        %s189 = ssub.s32 %s11, 1
        // Predicated region
        $region37: #{_decoder_img_forward.2} parent=35 // pred_check
          %p190 = pneg %p112
        $region38: #{_decoder_img_forward.2} parent=35 // pred_check_branch
          %192 = sbr.rel (%p190) target = $region40
        $region39: #{_decoder_img_forward.2} parent=35 // pred_region
          %194 = dma.done [#allocation3], 16
        $region40: #{_decoder_img_forward.2} parent=35 // pred_fallthru
          _
        %195 = sfence
        %p196 = scmp.lt.s32.totalorder %s20, 1
        %s197 = scalar_select %p196, %s20, 1
        %s198 = smul.addr %s197, 12
        %s199 = smul.addr %s198, 8
        %s200 = scalar_lea.vmem %s0, %s199
        %p201 = pneg %p49
        %p202 = pneg %p46
        %p203 = pneg %p70
        %p204 = pneg %p67
        %p205 = pneg %p91
        %p206 = pneg %p88
        %p207 = pneg %p112
        %p208 = pneg %p109
        %p209 = pneg %p140
        %p210 = pneg %p137
        %s211 = smul.u32 5, %s21
        %p212 = scmp.lt.s32.totalorder %s20, 1
        %s213 = scalar_select %p212, %s20, 1
        %p214 = scmp.lt.s32.totalorder %s211, 4
        %s215 = scalar_select %p214, %s211, 4
        %s216 = smul.addr %s213, 5
        %s217 = sadd.s32 %s215, %s216
        %s218 = smul.addr %s217, 8
        %s219 = scalar_lea.vmem %s4, %s218
        %p220 = scmp.lt.s32.totalorder %s20, 1
        %s221 = scalar_select %p220, %s20, 1
        %s222 = smul.addr %s221, 12
        %s223 = smul.addr %s222, 8
        %s224 = scalar_lea.vmem %s0, %s223
        %s225 = smul.u32 5, %s21
        %p226 = scmp.lt.s32.totalorder %s20, 1
        %s227 = scalar_select %p226, %s20, 1
        %p228 = scmp.lt.s32.totalorder %s225, 4
        %s229 = scalar_select %p228, %s225, 4
        %s230 = smul.addr %s227, 5
        %s231 = sadd.s32 %s229, %s230
        %s232 = smul.addr %s231, 8
        %s233 = scalar_lea.vmem %s4, %s232
        %s234 = smul.u32 5, %s21
        %s235 = smul.u32 %s21, 5
        %s236 = smul.u32 %s235, 16
        %s237 = scalar_lea.vmem %s224, %s236
        %v238 = vld [vmem:[%s237] sm:$0xff]
        %v239 = vld [vmem:[%s237 + $0x8] sm:$0x1]
        %v240 = vld [vmem:[%s237 + $0x10] sm:$0xff]
        %v241 = vld [vmem:[%s237 + $0x18] sm:$0x1]
        %v242 = vld [vmem:[%s237 + $0x20] sm:$0xff]
        %v243 = vld [vmem:[%s237 + $0x28] sm:$0x1]
        %v244 = vld [vmem:[%s237 + $0x30] sm:$0xff]
        %v245 = vld [vmem:[%s237 + $0x38] sm:$0x1]
        %v246 = vld [vmem:[%s237 + $0x40] sm:$0xff]
        %v247 = vld [vmem:[%s237 + $0x48] sm:$0x1]
        %v248 = vld [vmem:[%s237 + $0x50] sm:$0xff]
        %v249 = vld [vmem:[%s237 + $0x58] sm:$0x1]
        %vm260 = vcmask 1046528
        %v261 = vrot.slane %v238, 1
        %v262 = vrot.slane %v239, 1
        %v263 = vsel %vm260, %v261, %v262
        %v264 = vrot.slane %v240, 1
        %v265 = vrot.slane %v241, 1
        %v266 = vsel %vm260, %v264, %v265
        %v267 = vrot.slane %v242, 1
        %v268 = vrot.slane %v243, 1
        %v269 = vsel %vm260, %v267, %v268
        %v270 = vrot.slane %v244, 1
        %v271 = vrot.slane %v245, 1
        %v272 = vsel %vm260, %v270, %v271
        %v273 = vrot.slane %v246, 1
        %v274 = vrot.slane %v247, 1
        %v275 = vsel %vm260, %v273, %v274
        %276 = vrot.lane.b32.xlu0 %v263, 32
        %v277 = vpop.permute.xlu0 %276
        %278 = vrot.lane.b32.xlu0 %v266, 32
        %v279 = vpop.permute.xlu0 %278
        %280 = vrot.lane.b32.xlu0 %v269, 32
        %v281 = vpop.permute.xlu0 %280
        %282 = vrot.lane.b32.xlu0 %v272, 32
        %v283 = vpop.permute.xlu0 %282
        %284 = vrot.lane.b32.xlu0 %v275, 32
        %v285 = vpop.permute.xlu0 %284
        %292 = vrot.lane.b32.xlu0 %v240, 64
        %v293 = vpop.permute.xlu0 %292
        %294 = vrot.lane.b32.xlu0 %v242, 64
        %v295 = vpop.permute.xlu0 %294
        %296 = vrot.lane.b32.xlu0 %v244, 64
        %v297 = vpop.permute.xlu0 %296
        %298 = vrot.lane.b32.xlu0 %v246, 64
        %v299 = vpop.permute.xlu0 %298
        %300 = vrot.lane.b32.xlu0 %v248, 64
        %v301 = vpop.permute.xlu0 %300
        %v308 = vrot.slane %v248, 1
        %v309 = vrot.slane %v249, 1
        %v310 = vsel %vm260, %v308, %v309
        %311 = vrot.lane.b32.xlu0 %v266, 96
        %v312 = vpop.permute.xlu0 %311
        %313 = vrot.lane.b32.xlu0 %v269, 96
        %v314 = vpop.permute.xlu0 %313
        %315 = vrot.lane.b32.xlu0 %v272, 96
        %v316 = vpop.permute.xlu0 %315
        %317 = vrot.lane.b32.xlu0 %v275, 96
        %v318 = vpop.permute.xlu0 %317
        %319 = vrot.lane.b32.xlu0 %v310, 96
        %v320 = vpop.permute.xlu0 %319
        %vm326 = vcmask 261120
        %v327 = vsel %vm326, %v238, %v277
        %v328 = vsel %vm326, %v240, %v279
        %v329 = vsel %vm326, %v242, %v281
        %v330 = vsel %vm326, %v244, %v283
        %v331 = vsel %vm326, %v246, %v285
        %vm332 = vcmask 523264
        %v333 = vsel %vm332, %v327, %v293
        %v334 = vsel %vm332, %v328, %v295
        %v335 = vsel %vm332, %v329, %v297
        %v336 = vsel %vm332, %v330, %v299
        %v337 = vsel %vm332, %v331, %v301
        %vm338 = vcmask 785408
        %v339 = vsel %vm338, %v333, %v312
        %v340 = vsel %vm338, %v334, %v314
        %v341 = vsel %vm338, %v335, %v316
        %v342 = vsel %vm338, %v336, %v318
        %v343 = vsel %vm338, %v337, %v320
        %v344 = vld [vmem:[%s1] sm:$0xff]
        %v345 = vld [vmem:[%s1 + $0x8] sm:$0xff]
        %v346 = vld [vmem:[%s1 + $0x10] sm:$0xff]
        %v347 = vld [vmem:[%s1 + $0x18] sm:$0xff]
        %v348 = vld [vmem:[%s1 + $0x20] sm:$0xff]
        %v349 = vld [vmem:[%s1 + $0x28] sm:$0xff]
        %v350 = vld [vmem:[%s1 + $0x30] sm:$0xff]
        %v351 = vld [vmem:[%s1 + $0x38] sm:$0xff]
        %v352 = vld [vmem:[%s1 + $0x40] sm:$0xff]
        %v353 = vld [vmem:[%s1 + $0x48] sm:$0xff]
        %v354 = vld [vmem:[%s1 + $0x50] sm:$0xff]
        %v355 = vld [vmem:[%s1 + $0x58] sm:$0xff]
        %v356 = vld [vmem:[%s1 + $0x60] sm:$0xff]
        %v357 = vld [vmem:[%s1 + $0x68] sm:$0xff]
        %v358 = vld [vmem:[%s1 + $0x70] sm:$0xff]
        %v359 = vld [vmem:[%s1 + $0x78] sm:$0xff]
        %v360 = vld [vmem:[%s2] sm:$0x1]
        %v362 = vperm.slane %v360, 0
        %364 = vmatpush.msra.mxu0 %v359
        %365 = vmatpush.msra.mxu0 %v358
        %366 = vmatpush.msra.mxu0 %v357
        %367 = vmatpush.msra.mxu0 %v356
        %368 = vmatpush.msra.mxu0 %v355
        %369 = vmatpush.msra.mxu0 %v354
        %370 = vmatpush.msra.mxu0 %v353
        %371 = vmatpush.msra.mxu0 %v352
        %372 = vmatpush.msra.mxu0 %v351
        %373 = vmatpush.msra.mxu0 %v350
        %374 = vmatpush.msra.mxu0 %v349
        %375 = vmatpush.msra.mxu0 %v348
        %376 = vmatpush.msra.mxu0 %v347
        %377 = vmatpush.msra.mxu0 %v346
        %378 = vmatpush.msra.mxu0 %v345
        %379 = vmatpush.msra.mxu0 %v344
        %380 = vmatmul.f32.gmra.mxu0 %v339
        %v381 = vpop.f32.mrf.mxu0
        %v382 = vadd.f32 %v362, %v381
        %383 = vmatmul.f32.gmra.mxu0 %v340
        %v384 = vpop.f32.mrf.mxu0
        %v385 = vadd.f32 %v362, %v384
        %386 = vmatmul.f32.gmra.mxu0 %v341
        %v387 = vpop.f32.mrf.mxu0
        %v388 = vadd.f32 %v362, %v387
        %389 = vmatmul.f32.gmra.mxu0 %v342
        %v390 = vpop.f32.mrf.mxu0
        %v391 = vadd.f32 %v362, %v390
        %392 = vmatmul.f32.gmra.mxu0 %v343
        %v393 = vpop.f32.mrf.mxu0
        %v394 = vadd.f32 %v362, %v393
        %395 = vdwg.mxu0
        %v396 = vmax.f32 %v382, 0.0
        %v397 = vmax.f32 %v385, 0.0
        %v398 = vmax.f32 %v388, 0.0
        %v399 = vmax.f32 %v391, 0.0
        %v400 = vmax.f32 %v394, 0.0
        %401 = vst [vmem:[%s233] sm:$0xff] %v396
        %402 = vst [vmem:[%s233 + $0x8] sm:$0xff] %v397
        %403 = vst [vmem:[%s233 + $0x10] sm:$0xff] %v398
        %404 = vst [vmem:[%s233 + $0x18] sm:$0xff] %v399
        %405 = vst [vmem:[%s233 + $0x20] sm:$0xff] %v400
        %s406 = smul.u32 5, %s21
        %p407 = scmp.lt.s32.totalorder %s20, 1
        %s408 = scalar_select %p407, %s20, 1
        %p409 = scmp.lt.s32.totalorder %s406, 4
        %s410 = scalar_select %p409, %s406, 4
        %s411 = smul.addr %s408, 5
        %s412 = sadd.s32 %s410, %s411
        %s413 = smul.addr %s412, 8
        %s414 = scalar_lea.vmem %s4, %s413
        // Predicated region
        $region41: #{_decoder_img_forward.2} parent=35 // pred_check
          %p415 = pneg %p137
        $region42: #{_decoder_img_forward.2} parent=35 // pred_check_branch
          %417 = sbr.rel (%p415) target = $region44
        $region43: #{_decoder_img_forward.2} parent=35 // pred_region
          %s418 = smul.u32 5, %s21
        $region44: #{_decoder_img_forward.2} parent=35 // pred_fallthru
          _
      $region36: #{_decoder_img_forward.2} parent=5 // pred_fallthru
        _
      %p419 = scmp.le.s32.totalorder 2, %s11
      // Predicated region
      $region45: #{_decoder_img_forward.2} parent=5 // pred_check
        %p420 = pneg %p419
      $region46: #{_decoder_img_forward.2} parent=5 // pred_check_branch
        %422 = sbr.rel (%p420) target = $region48
      $region47: #{_decoder_img_forward.2} parent=5 // pred_region
        %s423 = ssub.s32 %s11, 2
        // Predicated region
        $region49: #{_decoder_img_forward.2} parent=47 // pred_check
          %p424 = pneg %p143
        $region50: #{_decoder_img_forward.2} parent=47 // pred_check_branch
          %426 = sbr.rel (%p424) target = $region52
        $region51: #{_decoder_img_forward.2} parent=47 // pred_region
          %s427 = smul.u32 5, %s23
          %p428 = scmp.lt.s32.totalorder %s22, 1
          %s429 = scalar_select %p428, %s22, 1
          %p430 = scmp.lt.s32.totalorder %s427, 4
          %s431 = scalar_select %p430, %s427, 4
          %s432 = smul.addr %s429, 5
          %s433 = sadd.s32 %s431, %s432
          %s434 = smul.addr %s433, 8
          %s435 = scalar_lea.vmem %s4, %s434
        $region52: #{_decoder_img_forward.2} parent=47 // pred_fallthru
          _
      $region48: #{_decoder_img_forward.2} parent=5 // pred_fallthru
        _
    $region6: #{_decoder_img_forward.2} parent=1 // loop_footer
      %s15 = sadd.s32 1, %s11
    $region7: #{_decoder_img_forward.2} parent=1 // loop_footer_branch
      %10 = sbr.rel target = $region3
    $region8: #{_decoder_img_forward.2} parent=1 // loop_exit
      _
    %436 = vsyncpa [#allocation3], 1
    %s437 = scalar_lea.sflag [#allocation3], 1
    %438 = vsyncpa %s437, 1

// kernel: _decoder_img_forward.3
$region0: #{_decoder_img_forward.3}
  #allocation0 [shape = 'u32[]', space=smem, size = 0x4, offset = 0x4, fixed_abs, tag = 'smem constant byte address 0x4 - core index']
  #allocation1 [shape = 'u32[72,128]{1,0:T(1,128)}', space=vmem, size = 0x9000, scoped, tag = 'internal scratch']
  %s0 = inlined_call_operand.vmem [shape: f32[2,25,25,8], index: 0, kind: input, shape index: {}]
  %s1 = inlined_call_operand.vmem [shape: f32[32,16], index: 1, kind: input, shape index: {}]
  %s2 = inlined_call_operand.vmem [shape: f32[1,16], index: 2, kind: input, shape index: {}]
  %s3 = inlined_call_operand.vmem [shape: f32[2], index: 3, kind: input, shape index: {}]
  %s4 = inlined_call_operand.vmem [shape: f32[2,24,24,16], index: 4, kind: output, shape index: {}]
  %s5 = sld [smem:[#allocation0]]
  $region53: #{_decoder_img_forward.3} parent=0
    _
  %s7 = ssub.s32 1, %s5
  %s8 = scalar_select 0, %s7, %s5
  $region1: #{_decoder_img_forward.3} parent=0
    #allocation2 [shape = 'u8[512]{0}', space=smem, size = 0x200, scoped, tag = 'input window, operand 3, single buffered']
    #allocation3 [shape = 's32[2]{0}', space=sflag, size = 0x8, scoped, tag = 'scoped memory for _decoder_img_forward.3']
    %9 = vsyncpa [#allocation3], 0
    loop: start=0, step=1, limit=8
    $region2: #{_decoder_img_forward.3} parent=1 // loop_pre_header
      _
    $region3: #{_decoder_img_forward.3} parent=1 // loop_header
      %s11 = sphi 0, %s15
      %p12 = scmp.ge.s32.totalorder %s11, 8
      %s18 = sphi 0, %s30
      %s19 = sphi 0, %s26
      %s20 = sphi 0, %s18
      %s21 = sphi 0, %s19
      %s22 = sphi 0, %s20
      %s23 = sphi 0, %s21
      %s33 = sphi 0, %s35
      %s36 = sphi 0, %s33
      %s37 = sphi 0, %s36
      %s53 = sphi 0, %s37
      %s57 = sphi 0, %s57
      %s59 = sphi 0, %s57
      %s60 = sphi 0, %s59
      %s74 = sphi 0, %s60
      %s78 = sphi 0, %s78
      %s80 = sphi 0, %s78
      %s81 = sphi 0, %s80
      %s95 = sphi 0, %s81
      %s99 = sphi 0, %s99
      %s101 = sphi 0, %s99
      %s102 = sphi 0, %s101
      %s116 = sphi 0, %s102
      %s124 = sphi 0, %s126
      %s127 = sphi 0, %s124
      %s128 = sphi 0, %s127
      %s144 = sphi 0, %s128
    $region4: #{_decoder_img_forward.3} parent=1 // loop_header_branch
      %14 = sbr.rel (%p12) target = $region8
    $region5: #{_decoder_img_forward.3} parent=1 // loop_body
      %s16 = ssub.s32 %s11, 1
      %s17 = ssub.s32 %s11, 2
      %s24 = sadd.s32 1, %s19
      %p25 = scmp.ge.s32.totalorder %s24, 3
      %s26 = scalar_select %p25, 0, %s24
      %s27 = sadd.s32 1, %s18
      %s28 = scalar_select %p25, %s27, %s18
      %p29 = scmp.ge.s32.totalorder %s28, 2
      %s30 = scalar_select %p29, 0, %s28
      %s31 = ssub.s32 %s18, %s30
      %p32 = scmp.eq.s32.totalorder %s31, 0
      %s34 = sadd.s32 %s33, 1
      %s35 = scalar_select %p32, %s33, %s34
      %p38 = pneg %p32
      %p39 = scmp.eq.s32.totalorder %s11, 5
      %p40 = por %p38, %p39
      %p41 = scmp.ne.s32.totalorder %s33, %s36
      %p42 = scmp.eq.s32.totalorder %s11, 0
      %p43 = por %p41, %p42
      %p44 = scmp.ne.s32.totalorder %s33, %s36
      %p45 = scmp.eq.s32.totalorder %s16, 5
      %p46 = por %p44, %p45
      %p47 = scmp.ne.s32.totalorder %s36, %s37
      %p48 = scmp.eq.s32.totalorder %s16, 0
      %p49 = por %p47, %p48
      %p50 = scmp.ne.s32.totalorder %s36, %s37
      %p51 = scmp.eq.s32.totalorder %s17, 5
      %p52 = por %p50, %p51
      %p54 = scmp.ne.s32.totalorder %s37, %s53
      %p55 = scmp.eq.s32.totalorder %s17, 0
      %p56 = por %p54, %p55
      %s58 = sadd.s32 %s57, 1
      %p61 = scmp.eq.s32.totalorder %s11, 5
      %p62 = scmp.ne.s32.totalorder %s57, %s59
      %p63 = scmp.eq.s32.totalorder %s11, 0
      %p64 = por %p62, %p63
      %p65 = scmp.ne.s32.totalorder %s57, %s59
      %p66 = scmp.eq.s32.totalorder %s16, 5
      %p67 = por %p65, %p66
      %p68 = scmp.ne.s32.totalorder %s59, %s60
      %p69 = scmp.eq.s32.totalorder %s16, 0
      %p70 = por %p68, %p69
      %p71 = scmp.ne.s32.totalorder %s59, %s60
      %p72 = scmp.eq.s32.totalorder %s17, 5
      %p73 = por %p71, %p72
      %p75 = scmp.ne.s32.totalorder %s60, %s74
      %p76 = scmp.eq.s32.totalorder %s17, 0
      %p77 = por %p75, %p76
      %s79 = sadd.s32 %s78, 1
      %p82 = scmp.eq.s32.totalorder %s11, 5
      %p83 = scmp.ne.s32.totalorder %s78, %s80
      %p84 = scmp.eq.s32.totalorder %s11, 0
      %p85 = por %p83, %p84
      %p86 = scmp.ne.s32.totalorder %s78, %s80
      %p87 = scmp.eq.s32.totalorder %s16, 5
      %p88 = por %p86, %p87
      %p89 = scmp.ne.s32.totalorder %s80, %s81
      %p90 = scmp.eq.s32.totalorder %s16, 0
      %p91 = por %p89, %p90
      %p92 = scmp.ne.s32.totalorder %s80, %s81
      %p93 = scmp.eq.s32.totalorder %s17, 5
      %p94 = por %p92, %p93
      %p96 = scmp.ne.s32.totalorder %s81, %s95
      %p97 = scmp.eq.s32.totalorder %s17, 0
      %p98 = por %p96, %p97
      %s100 = sadd.s32 %s99, 1
      %p103 = scmp.eq.s32.totalorder %s11, 5
      %p104 = scmp.ne.s32.totalorder %s99, %s101
      %p105 = scmp.eq.s32.totalorder %s11, 0
      %p106 = por %p104, %p105
      %p107 = scmp.ne.s32.totalorder %s99, %s101
      %p108 = scmp.eq.s32.totalorder %s16, 5
      %p109 = por %p107, %p108
      %p110 = scmp.ne.s32.totalorder %s101, %s102
      %p111 = scmp.eq.s32.totalorder %s16, 0
      %p112 = por %p110, %p111
      %p113 = scmp.ne.s32.totalorder %s101, %s102
      %p114 = scmp.eq.s32.totalorder %s17, 5
      %p115 = por %p113, %p114
      %p117 = scmp.ne.s32.totalorder %s102, %s116
      %p118 = scmp.eq.s32.totalorder %s17, 0
      %p119 = por %p117, %p118
      %s120 = ssub.s32 %s18, %s30
      %s121 = ssub.s32 %s19, %s26
      %s122 = sor.u32 %s120, %s121
      %p123 = scmp.eq.s32.totalorder %s122, 0
      %s125 = sadd.s32 %s124, 1
      %s126 = scalar_select %p123, %s124, %s125
      %p129 = pneg %p123
      %p130 = scmp.eq.s32.totalorder %s11, 5
      %p131 = por %p129, %p130
      %p132 = scmp.ne.s32.totalorder %s124, %s127
      %p133 = scmp.eq.s32.totalorder %s11, 0
      %p134 = por %p132, %p133
      %p135 = scmp.ne.s32.totalorder %s124, %s127
      %p136 = scmp.eq.s32.totalorder %s16, 5
      %p137 = por %p135, %p136
      %p138 = scmp.ne.s32.totalorder %s127, %s128
      %p139 = scmp.eq.s32.totalorder %s16, 0
      %p140 = por %p138, %p139
      %p141 = scmp.ne.s32.totalorder %s127, %s128
      %p142 = scmp.eq.s32.totalorder %s17, 5
      %p143 = por %p141, %p142
      %p145 = scmp.ne.s32.totalorder %s128, %s144
      %p146 = scmp.eq.s32.totalorder %s17, 0
      %p147 = por %p145, %p146
      %p148 = scmp.le.s32.totalorder 1, %s11
      %p149 = scmp.lt.s32.totalorder %s11, 7
      %p150 = pnand %p148, %p149
      %p151 = pneg %p150
      // Predicated region
      $region9: #{_decoder_img_forward.3} parent=5 // pred_check
        _
      $region10: #{_decoder_img_forward.3} parent=5 // pred_check_branch
        %153 = sbr.rel (%p150) target = $region12
      $region11: #{_decoder_img_forward.3} parent=5 // pred_region
        %s154 = ssub.s32 %s11, 1
        // Predicated region
        $region13: #{_decoder_img_forward.3} parent=11 // pred_check
          %p155 = pneg %p70
        $region14: #{_decoder_img_forward.3} parent=11 // pred_check_branch
          %157 = sbr.rel (%p155) target = $region16
        $region15: #{_decoder_img_forward.3} parent=11 // pred_region
          _
        $region16: #{_decoder_img_forward.3} parent=11 // pred_fallthru
          _
        // Predicated region
        $region17: #{_decoder_img_forward.3} parent=11 // pred_check
          %p158 = pneg %p91
        $region18: #{_decoder_img_forward.3} parent=11 // pred_check_branch
          %160 = sbr.rel (%p158) target = $region20
        $region19: #{_decoder_img_forward.3} parent=11 // pred_region
          _
        $region20: #{_decoder_img_forward.3} parent=11 // pred_fallthru
          _
        // Predicated region
        $region21: #{_decoder_img_forward.3} parent=11 // pred_check
          %p161 = pneg %p112
        $region22: #{_decoder_img_forward.3} parent=11 // pred_check_branch
          %163 = sbr.rel (%p161) target = $region24
        $region23: #{_decoder_img_forward.3} parent=11 // pred_region
          %165 = vsyncadd [#allocation3], 0
          %s167 = sshll.u32 %s3, 4
          %s168 = int_to_ptr.vmem [resolvable:$true] %s167
          %170 = dma.vmem_to_smem %s168, 16, [#allocation2], [#allocation3]
        $region24: #{_decoder_img_forward.3} parent=11 // pred_fallthru
          _
      $region12: #{_decoder_img_forward.3} parent=5 // pred_fallthru
        _
      %p171 = scmp.lt.s32.totalorder %s11, 6
      // Predicated region
      $region25: #{_decoder_img_forward.3} parent=5 // pred_check
        %p172 = pneg %p171
      $region26: #{_decoder_img_forward.3} parent=5 // pred_check_branch
        %174 = sbr.rel (%p172) target = $region28
      $region27: #{_decoder_img_forward.3} parent=5 // pred_region
        // Predicated region
        $region29: #{_decoder_img_forward.3} parent=27 // pred_check
          %p175 = pneg %p43
        $region30: #{_decoder_img_forward.3} parent=27 // pred_check_branch
          %177 = sbr.rel (%p175) target = $region32
        $region31: #{_decoder_img_forward.3} parent=27 // pred_region
          %p178 = scmp.lt.s32.totalorder %s18, 1
          %s179 = scalar_select %p178, %s18, 1
          %s180 = smul.addr %s179, 100
          %s181 = smul.addr %s180, 8
          %s182 = scalar_lea.vmem %s0, %s181
        $region32: #{_decoder_img_forward.3} parent=27 // pred_fallthru
          _
      $region28: #{_decoder_img_forward.3} parent=5 // pred_fallthru
        _
      %p183 = scmp.le.s32.totalorder 1, %s11
      %p184 = scmp.lt.s32.totalorder %s11, 7
      %p185 = pnand %p183, %p184
      %p186 = pneg %p185
      // Predicated region
      $region33: #{_decoder_img_forward.3} parent=5 // pred_check
        _
      $region34: #{_decoder_img_forward.3} parent=5 // pred_check_branch
        %188 = sbr.rel (%p185) target = $region36
      $region35: #{_decoder_img_forward.3} parent=5 // pred_region
        %s189 = ssub.s32 %s11, 1
        // Predicated region
        $region37: #{_decoder_img_forward.3} parent=35 // pred_check
          %p190 = pneg %p112
        $region38: #{_decoder_img_forward.3} parent=35 // pred_check_branch
          %192 = sbr.rel (%p190) target = $region40
        $region39: #{_decoder_img_forward.3} parent=35 // pred_region
          %194 = dma.done [#allocation3], 16
        $region40: #{_decoder_img_forward.3} parent=35 // pred_fallthru
          _
        %195 = sfence
        %p196 = scmp.lt.s32.totalorder %s20, 1
        %s197 = scalar_select %p196, %s20, 1
        %s198 = smul.addr %s197, 100
        %s199 = smul.addr %s198, 8
        %s200 = scalar_lea.vmem %s0, %s199
        %p201 = pneg %p49
        %p202 = pneg %p46
        %p203 = pneg %p70
        %p204 = pneg %p67
        %p205 = pneg %p91
        %p206 = pneg %p88
        %p207 = pneg %p112
        %p208 = pneg %p109
        %p209 = pneg %p140
        %p210 = pneg %p137
        %s211 = smul.u32 8, %s21
        %p212 = scmp.lt.s32.totalorder %s20, 1
        %s213 = scalar_select %p212, %s20, 1
        %p214 = scmp.lt.s32.totalorder %s211, 23
        %s215 = scalar_select %p214, %s211, 23
        %s216 = smul.addr %s215, 3
        %s217 = smul.addr %s213, 72
        %s218 = sadd.s32 %s216, %s217
        %s219 = smul.addr %s218, 8
        %s220 = scalar_lea.vmem %s4, %s219
        %p221 = scmp.lt.s32.totalorder %s20, 1
        %s222 = scalar_select %p221, %s20, 1
        %s223 = smul.addr %s222, 100
        %s224 = smul.addr %s223, 8
        %s225 = scalar_lea.vmem %s0, %s224
        %s226 = smul.u32 8, %s21
        %p227 = scmp.lt.s32.totalorder %s20, 1
        %s228 = scalar_select %p227, %s20, 1
        %p229 = scmp.lt.s32.totalorder %s226, 23
        %s230 = scalar_select %p229, %s226, 23
        %s231 = smul.addr %s230, 3
        %s232 = smul.addr %s228, 72
        %s233 = sadd.s32 %s231, %s232
        %s234 = smul.addr %s233, 8
        %s235 = scalar_lea.vmem %s4, %s234
        %s236 = smul.u32 8, %s21
        %s237 = smul.u32 %s21, 8
        %s238 = smul.u32 %s237, 32
        %s239 = scalar_lea.vmem %s225, %s238
        %v240 = vld [vmem:[%s239] sm:$0xff]
        %v241 = vld [vmem:[%s239 + $0x8] sm:$0xff]
        %v242 = vld [vmem:[%s239 + $0x10] sm:$0xff]
        %v243 = vld [vmem:[%s239 + $0x18] sm:$0x1]
        %v244 = vld [vmem:[%s239 + $0x20] sm:$0xff]
        %v245 = vld [vmem:[%s239 + $0x28] sm:$0xff]
        %v246 = vld [vmem:[%s239 + $0x30] sm:$0xff]
        %v247 = vld [vmem:[%s239 + $0x38] sm:$0x1]
        %v248 = vld [vmem:[%s239 + $0x40] sm:$0xff]
        %v249 = vld [vmem:[%s239 + $0x48] sm:$0xff]
        %v250 = vld [vmem:[%s239 + $0x50] sm:$0xff]
        %v251 = vld [vmem:[%s239 + $0x58] sm:$0x1]
        %v252 = vld [vmem:[%s239 + $0x60] sm:$0xff]
        %v253 = vld [vmem:[%s239 + $0x68] sm:$0xff]
        %v254 = vld [vmem:[%s239 + $0x70] sm:$0xff]
        %v255 = vld [vmem:[%s239 + $0x78] sm:$0x1]
        %v256 = vld [vmem:[%s239 + $0x80] sm:$0xff]
        %v257 = vld [vmem:[%s239 + $0x88] sm:$0xff]
        %v258 = vld [vmem:[%s239 + $0x90] sm:$0xff]
        %v259 = vld [vmem:[%s239 + $0x98] sm:$0x1]
        %v260 = vld [vmem:[%s239 + $0xa0] sm:$0xff]
        %v261 = vld [vmem:[%s239 + $0xa8] sm:$0xff]
        %v262 = vld [vmem:[%s239 + $0xb0] sm:$0xff]
        %v263 = vld [vmem:[%s239 + $0xb8] sm:$0x1]
        %v264 = vld [vmem:[%s239 + $0xc0] sm:$0xff]
        %v265 = vld [vmem:[%s239 + $0xc8] sm:$0xff]
        %v266 = vld [vmem:[%s239 + $0xd0] sm:$0xff]
        %v267 = vld [vmem:[%s239 + $0xd8] sm:$0x1]
        %v268 = vld [vmem:[%s239 + $0xe0] sm:$0xff]
        %v269 = vld [vmem:[%s239 + $0xe8] sm:$0xff]
        %v270 = vld [vmem:[%s239 + $0xf0] sm:$0xff]
        %v271 = vld [vmem:[%s239 + $0xf8] sm:$0x1]
        %v272 = vld [vmem:[%s239 + $0x100] sm:$0xff]
        %v273 = vld [vmem:[%s239 + $0x108] sm:$0xff]
        %v274 = vld [vmem:[%s239 + $0x110] sm:$0xff]
        %v275 = vld [vmem:[%s239 + $0x118] sm:$0x1]
        %vm308 = vcmask 1046528
        %v309 = vrot.slane %v240, 1
        %v310 = vrot.slane %v241, 1
        %v311 = vsel %vm308, %v309, %v310
        %v312 = vrot.slane %v242, 1
        %v313 = vsel %vm308, %v310, %v312
        %v314 = vrot.slane %v243, 1
        %v315 = vsel %vm308, %v312, %v314
        %v316 = vrot.slane %v244, 1
        %v317 = vrot.slane %v245, 1
        %v318 = vsel %vm308, %v316, %v317
        %v319 = vrot.slane %v246, 1
        %v320 = vsel %vm308, %v317, %v319
        %v321 = vrot.slane %v247, 1
        %v322 = vsel %vm308, %v319, %v321
        %v323 = vrot.slane %v248, 1
        %v324 = vrot.slane %v249, 1
        %v325 = vsel %vm308, %v323, %v324
        %v326 = vrot.slane %v250, 1
        %v327 = vsel %vm308, %v324, %v326
        %v328 = vrot.slane %v251, 1
        %v329 = vsel %vm308, %v326, %v328
        %v330 = vrot.slane %v252, 1
        %v331 = vrot.slane %v253, 1
        %v332 = vsel %vm308, %v330, %v331
        %v333 = vrot.slane %v254, 1
        %v334 = vsel %vm308, %v331, %v333
        %v335 = vrot.slane %v255, 1
        %v336 = vsel %vm308, %v333, %v335
        %v337 = vrot.slane %v256, 1
        %v338 = vrot.slane %v257, 1
        %v339 = vsel %vm308, %v337, %v338
        %v340 = vrot.slane %v258, 1
        %v341 = vsel %vm308, %v338, %v340
        %v342 = vrot.slane %v259, 1
        %v343 = vsel %vm308, %v340, %v342
        %v344 = vrot.slane %v260, 1
        %v345 = vrot.slane %v261, 1
        %v346 = vsel %vm308, %v344, %v345
        %v347 = vrot.slane %v262, 1
        %v348 = vsel %vm308, %v345, %v347
        %v349 = vrot.slane %v263, 1
        %v350 = vsel %vm308, %v347, %v349
        %v351 = vrot.slane %v264, 1
        %v352 = vrot.slane %v265, 1
        %v353 = vsel %vm308, %v351, %v352
        %v354 = vrot.slane %v266, 1
        %v355 = vsel %vm308, %v352, %v354
        %v356 = vrot.slane %v267, 1
        %v357 = vsel %vm308, %v354, %v356
        %v358 = vrot.slane %v268, 1
        %v359 = vrot.slane %v269, 1
        %v360 = vsel %vm308, %v358, %v359
        %v361 = vrot.slane %v270, 1
        %v362 = vsel %vm308, %v359, %v361
        %v363 = vrot.slane %v271, 1
        %v364 = vsel %vm308, %v361, %v363
        %365 = vrot.lane.b32.xlu0 %v311, 8
        %v366 = vpop.permute.xlu0 %365
        %367 = vrot.lane.b32.xlu0 %v313, 8
        %v368 = vpop.permute.xlu0 %367
        %369 = vrot.lane.b32.xlu0 %v315, 8
        %v370 = vpop.permute.xlu0 %369
        %371 = vrot.lane.b32.xlu0 %v318, 8
        %v372 = vpop.permute.xlu0 %371
        %373 = vrot.lane.b32.xlu0 %v320, 8
        %v374 = vpop.permute.xlu0 %373
        %375 = vrot.lane.b32.xlu0 %v322, 8
        %v376 = vpop.permute.xlu0 %375
        %377 = vrot.lane.b32.xlu0 %v325, 8
        %v378 = vpop.permute.xlu0 %377
        %379 = vrot.lane.b32.xlu0 %v327, 8
        %v380 = vpop.permute.xlu0 %379
        %381 = vrot.lane.b32.xlu0 %v329, 8
        %v382 = vpop.permute.xlu0 %381
        %383 = vrot.lane.b32.xlu0 %v332, 8
        %v384 = vpop.permute.xlu0 %383
        %385 = vrot.lane.b32.xlu0 %v334, 8
        %v386 = vpop.permute.xlu0 %385
        %387 = vrot.lane.b32.xlu0 %v336, 8
        %v388 = vpop.permute.xlu0 %387
        %389 = vrot.lane.b32.xlu0 %v339, 8
        %v390 = vpop.permute.xlu0 %389
        %391 = vrot.lane.b32.xlu0 %v341, 8
        %v392 = vpop.permute.xlu0 %391
        %393 = vrot.lane.b32.xlu0 %v343, 8
        %v394 = vpop.permute.xlu0 %393
        %395 = vrot.lane.b32.xlu0 %v346, 8
        %v396 = vpop.permute.xlu0 %395
        %397 = vrot.lane.b32.xlu0 %v348, 8
        %v398 = vpop.permute.xlu0 %397
        %399 = vrot.lane.b32.xlu0 %v350, 8
        %v400 = vpop.permute.xlu0 %399
        %401 = vrot.lane.b32.xlu0 %v353, 8
        %v402 = vpop.permute.xlu0 %401
        %403 = vrot.lane.b32.xlu0 %v355, 8
        %v404 = vpop.permute.xlu0 %403
        %405 = vrot.lane.b32.xlu0 %v357, 8
        %v406 = vpop.permute.xlu0 %405
        %407 = vrot.lane.b32.xlu0 %v360, 8
        %v408 = vpop.permute.xlu0 %407
        %409 = vrot.lane.b32.xlu0 %v362, 8
        %v410 = vpop.permute.xlu0 %409
        %411 = vrot.lane.b32.xlu0 %v364, 8
        %v412 = vpop.permute.xlu0 %411
        %440 = vrot.lane.b32.xlu0 %v244, 16
        %v441 = vpop.permute.xlu0 %440
        %442 = vrot.lane.b32.xlu0 %v245, 16
        %v443 = vpop.permute.xlu0 %442
        %444 = vrot.lane.b32.xlu0 %v246, 16
        %v445 = vpop.permute.xlu0 %444
        %446 = vrot.lane.b32.xlu0 %v248, 16
        %v447 = vpop.permute.xlu0 %446
        %448 = vrot.lane.b32.xlu0 %v249, 16
        %v449 = vpop.permute.xlu0 %448
        %450 = vrot.lane.b32.xlu0 %v250, 16
        %v451 = vpop.permute.xlu0 %450
        %452 = vrot.lane.b32.xlu0 %v252, 16
        %v453 = vpop.permute.xlu0 %452
        %454 = vrot.lane.b32.xlu0 %v253, 16
        %v455 = vpop.permute.xlu0 %454
        %456 = vrot.lane.b32.xlu0 %v254, 16
        %v457 = vpop.permute.xlu0 %456
        %458 = vrot.lane.b32.xlu0 %v256, 16
        %v459 = vpop.permute.xlu0 %458
        %460 = vrot.lane.b32.xlu0 %v257, 16
        %v461 = vpop.permute.xlu0 %460
        %462 = vrot.lane.b32.xlu0 %v258, 16
        %v463 = vpop.permute.xlu0 %462
        %464 = vrot.lane.b32.xlu0 %v260, 16
        %v465 = vpop.permute.xlu0 %464
        %466 = vrot.lane.b32.xlu0 %v261, 16
        %v467 = vpop.permute.xlu0 %466
        %468 = vrot.lane.b32.xlu0 %v262, 16
        %v469 = vpop.permute.xlu0 %468
        %470 = vrot.lane.b32.xlu0 %v264, 16
        %v471 = vpop.permute.xlu0 %470
        %472 = vrot.lane.b32.xlu0 %v265, 16
        %v473 = vpop.permute.xlu0 %472
        %474 = vrot.lane.b32.xlu0 %v266, 16
        %v475 = vpop.permute.xlu0 %474
        %476 = vrot.lane.b32.xlu0 %v268, 16
        %v477 = vpop.permute.xlu0 %476
        %478 = vrot.lane.b32.xlu0 %v269, 16
        %v479 = vpop.permute.xlu0 %478
        %480 = vrot.lane.b32.xlu0 %v270, 16
        %v481 = vpop.permute.xlu0 %480
        %482 = vrot.lane.b32.xlu0 %v272, 16
        %v483 = vpop.permute.xlu0 %482
        %484 = vrot.lane.b32.xlu0 %v273, 16
        %v485 = vpop.permute.xlu0 %484
        %486 = vrot.lane.b32.xlu0 %v274, 16
        %v487 = vpop.permute.xlu0 %486
        %v513 = vrot.slane %v272, 1
        %v514 = vrot.slane %v273, 1
        %v515 = vsel %vm308, %v513, %v514
        %v516 = vrot.slane %v274, 1
        %v517 = vsel %vm308, %v514, %v516
        %v518 = vrot.slane %v275, 1
        %v519 = vsel %vm308, %v516, %v518
        %520 = vrot.lane.b32.xlu0 %v318, 24
        %v521 = vpop.permute.xlu0 %520
        %522 = vrot.lane.b32.xlu0 %v320, 24
        %v523 = vpop.permute.xlu0 %522
        %524 = vrot.lane.b32.xlu0 %v322, 24
        %v525 = vpop.permute.xlu0 %524
        %526 = vrot.lane.b32.xlu0 %v325, 24
        %v527 = vpop.permute.xlu0 %526
        %528 = vrot.lane.b32.xlu0 %v327, 24
        %v529 = vpop.permute.xlu0 %528
        %530 = vrot.lane.b32.xlu0 %v329, 24
        %v531 = vpop.permute.xlu0 %530
        %532 = vrot.lane.b32.xlu0 %v332, 24
        %v533 = vpop.permute.xlu0 %532
        %534 = vrot.lane.b32.xlu0 %v334, 24
        %v535 = vpop.permute.xlu0 %534
        %536 = vrot.lane.b32.xlu0 %v336, 24
        %v537 = vpop.permute.xlu0 %536
        %538 = vrot.lane.b32.xlu0 %v339, 24
        %v539 = vpop.permute.xlu0 %538
        %540 = vrot.lane.b32.xlu0 %v341, 24
        %v541 = vpop.permute.xlu0 %540
        %542 = vrot.lane.b32.xlu0 %v343, 24
        %v543 = vpop.permute.xlu0 %542
        %544 = vrot.lane.b32.xlu0 %v346, 24
        %v545 = vpop.permute.xlu0 %544
        %546 = vrot.lane.b32.xlu0 %v348, 24
        %v547 = vpop.permute.xlu0 %546
        %548 = vrot.lane.b32.xlu0 %v350, 24
        %v549 = vpop.permute.xlu0 %548
        %550 = vrot.lane.b32.xlu0 %v353, 24
        %v551 = vpop.permute.xlu0 %550
        %552 = vrot.lane.b32.xlu0 %v355, 24
        %v553 = vpop.permute.xlu0 %552
        %554 = vrot.lane.b32.xlu0 %v357, 24
        %v555 = vpop.permute.xlu0 %554
        %556 = vrot.lane.b32.xlu0 %v360, 24
        %v557 = vpop.permute.xlu0 %556
        %558 = vrot.lane.b32.xlu0 %v362, 24
        %v559 = vpop.permute.xlu0 %558
        %560 = vrot.lane.b32.xlu0 %v364, 24
        %v561 = vpop.permute.xlu0 %560
        %562 = vrot.lane.b32.xlu0 %v515, 24
        %v563 = vpop.permute.xlu0 %562
        %564 = vrot.lane.b32.xlu0 %v517, 24
        %v565 = vpop.permute.xlu0 %564
        %566 = vrot.lane.b32.xlu0 %v519, 24
        %v567 = vpop.permute.xlu0 %566
        %vm592 = vcmask 64512
        %v593 = vsel %vm592, %v240, %v366
        %v594 = vsel %vm592, %v241, %v368
        %v595 = vsel %vm592, %v242, %v370
        %v596 = vsel %vm592, %v244, %v372
        %v597 = vsel %vm592, %v245, %v374
        %v598 = vsel %vm592, %v246, %v376
        %v599 = vsel %vm592, %v248, %v378
        %v600 = vsel %vm592, %v249, %v380
        %v601 = vsel %vm592, %v250, %v382
        %v602 = vsel %vm592, %v252, %v384
        %v603 = vsel %vm592, %v253, %v386
        %v604 = vsel %vm592, %v254, %v388
        %v605 = vsel %vm592, %v256, %v390
        %v606 = vsel %vm592, %v257, %v392
        %v607 = vsel %vm592, %v258, %v394
        %v608 = vsel %vm592, %v260, %v396
        %v609 = vsel %vm592, %v261, %v398
        %v610 = vsel %vm592, %v262, %v400
        %v611 = vsel %vm592, %v264, %v402
        %v612 = vsel %vm592, %v265, %v404
        %v613 = vsel %vm592, %v266, %v406
        %v614 = vsel %vm592, %v268, %v408
        %v615 = vsel %vm592, %v269, %v410
        %v616 = vsel %vm592, %v270, %v412
        %vm617 = vcmask 130048
        %v618 = vsel %vm617, %v593, %v441
        %v619 = vsel %vm617, %v594, %v443
        %v620 = vsel %vm617, %v595, %v445
        %v621 = vsel %vm617, %v596, %v447
        %v622 = vsel %vm617, %v597, %v449
        %v623 = vsel %vm617, %v598, %v451
        %v624 = vsel %vm617, %v599, %v453
        %v625 = vsel %vm617, %v600, %v455
        %v626 = vsel %vm617, %v601, %v457
        %v627 = vsel %vm617, %v602, %v459
        %v628 = vsel %vm617, %v603, %v461
        %v629 = vsel %vm617, %v604, %v463
        %v630 = vsel %vm617, %v605, %v465
        %v631 = vsel %vm617, %v606, %v467
        %v632 = vsel %vm617, %v607, %v469
        %v633 = vsel %vm617, %v608, %v471
        %v634 = vsel %vm617, %v609, %v473
        %v635 = vsel %vm617, %v610, %v475
        %v636 = vsel %vm617, %v611, %v477
        %v637 = vsel %vm617, %v612, %v479
        %v638 = vsel %vm617, %v613, %v481
        %v639 = vsel %vm617, %v614, %v483
        %v640 = vsel %vm617, %v615, %v485
        %v641 = vsel %vm617, %v616, %v487
        %vm642 = vcmask 195584
        %v643 = vsel %vm642, %v618, %v521
        %v644 = vsel %vm642, %v619, %v523
        %v645 = vsel %vm642, %v620, %v525
        %v646 = vsel %vm642, %v621, %v527
        %v647 = vsel %vm642, %v622, %v529
        %v648 = vsel %vm642, %v623, %v531
        %v649 = vsel %vm642, %v624, %v533
        %v650 = vsel %vm642, %v625, %v535
        %v651 = vsel %vm642, %v626, %v537
        %v652 = vsel %vm642, %v627, %v539
        %v653 = vsel %vm642, %v628, %v541
        %v654 = vsel %vm642, %v629, %v543
        %v655 = vsel %vm642, %v630, %v545
        %v656 = vsel %vm642, %v631, %v547
        %v657 = vsel %vm642, %v632, %v549
        %v658 = vsel %vm642, %v633, %v551
        %v659 = vsel %vm642, %v634, %v553
        %v660 = vsel %vm642, %v635, %v555
        %v661 = vsel %vm642, %v636, %v557
        %v662 = vsel %vm642, %v637, %v559
        %v663 = vsel %vm642, %v638, %v561
        %v664 = vsel %vm642, %v639, %v563
        %v665 = vsel %vm642, %v640, %v565
        %v666 = vsel %vm642, %v641, %v567
        %v667 = vld [vmem:[%s1] sm:$0xff]
        %v668 = vld [vmem:[%s1 + $0x8] sm:$0xff]
        %v669 = vld [vmem:[%s1 + $0x10] sm:$0xff]
        %v670 = vld [vmem:[%s1 + $0x18] sm:$0xff]
        %v671 = vld [vmem:[%s2] sm:$0x1]
        %v673 = vperm.slane %v671, 0
        %vm675 = vcmask 261120
        %v677 = vsel %vm675, %v643, 0
        %v680 = vsel %vm675, %v644, 0
        %v683 = vsel %vm675, %v645, 0
        %v686 = vsel %vm675, %v646, 0
        %v689 = vsel %vm675, %v647, 0
        %v692 = vsel %vm675, %v648, 0
        %v695 = vsel %vm675, %v649, 0
        %v698 = vsel %vm675, %v650, 0
        %v701 = vsel %vm675, %v651, 0
        %v704 = vsel %vm675, %v652, 0
        %v707 = vsel %vm675, %v653, 0
        %v710 = vsel %vm675, %v654, 0
        %v713 = vsel %vm675, %v655, 0
        %v716 = vsel %vm675, %v656, 0
        %v719 = vsel %vm675, %v657, 0
        %v722 = vsel %vm675, %v658, 0
        %v725 = vsel %vm675, %v659, 0
        %v728 = vsel %vm675, %v660, 0
        %v731 = vsel %vm675, %v661, 0
        %v734 = vsel %vm675, %v662, 0
        %v737 = vsel %vm675, %v663, 0
        %v740 = vsel %vm675, %v664, 0
        %v743 = vsel %vm675, %v665, 0
        %v746 = vsel %vm675, %v666, 0
        %748 = vmatpush.msra.mxu0 0.0
        %749 = vmatpush.msra.mxu0 0.0
        %750 = vmatpush.msra.mxu0 0.0
        %751 = vmatpush.msra.mxu0 0.0
        %752 = vmatpush.msra.mxu0 0.0
        %753 = vmatpush.msra.mxu0 0.0
        %754 = vmatpush.msra.mxu0 0.0
        %755 = vmatpush.msra.mxu0 0.0
        %756 = vmatpush.msra.mxu0 0.0
        %757 = vmatpush.msra.mxu0 0.0
        %758 = vmatpush.msra.mxu0 0.0
        %759 = vmatpush.msra.mxu0 0.0
        %760 = vmatpush.msra.mxu0 %v670
        %761 = vmatpush.msra.mxu0 %v669
        %762 = vmatpush.msra.mxu0 %v668
        %763 = vmatpush.msra.mxu0 %v667
        %764 = vmatmul.f32.gmra.mxu0 %v677
        %v765 = vpop.f32.mrf.mxu0
        %v766 = vadd.f32 %v673, %v765
        %767 = vmatmul.f32.gmra.mxu0 %v680
        %v768 = vpop.f32.mrf.mxu0
        %v769 = vadd.f32 %v673, %v768
        %770 = vmatmul.f32.gmra.mxu0 %v683
        %v771 = vpop.f32.mrf.mxu0
        %v772 = vadd.f32 %v673, %v771
        %773 = vmatmul.f32.gmra.mxu0 %v686
        %v774 = vpop.f32.mrf.mxu0
        %v775 = vadd.f32 %v673, %v774
        %776 = vmatmul.f32.gmra.mxu0 %v689
        %v777 = vpop.f32.mrf.mxu0
        %v778 = vadd.f32 %v673, %v777
        %779 = vmatmul.f32.gmra.mxu0 %v692
        %v780 = vpop.f32.mrf.mxu0
        %v781 = vadd.f32 %v673, %v780
        %782 = vmatmul.f32.gmra.mxu0 %v695
        %v783 = vpop.f32.mrf.mxu0
        %v784 = vadd.f32 %v673, %v783
        %785 = vmatmul.f32.gmra.mxu0 %v698
        %v786 = vpop.f32.mrf.mxu0
        %v787 = vadd.f32 %v673, %v786
        %788 = vmatmul.f32.gmra.mxu0 %v701
        %v789 = vpop.f32.mrf.mxu0
        %v790 = vadd.f32 %v673, %v789
        %791 = vmatmul.f32.gmra.mxu0 %v704
        %v792 = vpop.f32.mrf.mxu0
        %v793 = vadd.f32 %v673, %v792
        %794 = vmatmul.f32.gmra.mxu0 %v707
        %v795 = vpop.f32.mrf.mxu0
        %v796 = vadd.f32 %v673, %v795
        %797 = vmatmul.f32.gmra.mxu0 %v710
        %v798 = vpop.f32.mrf.mxu0
        %v799 = vadd.f32 %v673, %v798
        %800 = vmatmul.f32.gmra.mxu0 %v713
        %v801 = vpop.f32.mrf.mxu0
        %v802 = vadd.f32 %v673, %v801
        %803 = vmatmul.f32.gmra.mxu0 %v716
        %v804 = vpop.f32.mrf.mxu0
        %v805 = vadd.f32 %v673, %v804
        %806 = vmatmul.f32.gmra.mxu0 %v719
        %v807 = vpop.f32.mrf.mxu0
        %v808 = vadd.f32 %v673, %v807
        %809 = vmatmul.f32.gmra.mxu0 %v722
        %v810 = vpop.f32.mrf.mxu0
        %v811 = vadd.f32 %v673, %v810
        %812 = vmatmul.f32.gmra.mxu0 %v725
        %v813 = vpop.f32.mrf.mxu0
        %v814 = vadd.f32 %v673, %v813
        %815 = vmatmul.f32.gmra.mxu0 %v728
        %v816 = vpop.f32.mrf.mxu0
        %v817 = vadd.f32 %v673, %v816
        %818 = vmatmul.f32.gmra.mxu0 %v731
        %v819 = vpop.f32.mrf.mxu0
        %v820 = vadd.f32 %v673, %v819
        %821 = vmatmul.f32.gmra.mxu0 %v734
        %v822 = vpop.f32.mrf.mxu0
        %v823 = vadd.f32 %v673, %v822
        %824 = vmatmul.f32.gmra.mxu0 %v737
        %v825 = vpop.f32.mrf.mxu0
        %v826 = vadd.f32 %v673, %v825
        %827 = vmatmul.f32.gmra.mxu0 %v740
        %v828 = vpop.f32.mrf.mxu0
        %v829 = vadd.f32 %v673, %v828
        %830 = vmatmul.f32.gmra.mxu0 %v743
        %v831 = vpop.f32.mrf.mxu0
        %v832 = vadd.f32 %v673, %v831
        %833 = vmatmul.f32.gmra.mxu0 %v746
        %v834 = vpop.f32.mrf.mxu0
        %v835 = vadd.f32 %v673, %v834
        %836 = vdwg.mxu0
        %v837 = vmax.f32 %v766, 0.0
        %v838 = vmax.f32 %v769, 0.0
        %v839 = vmax.f32 %v772, 0.0
        %v840 = vmax.f32 %v775, 0.0
        %v841 = vmax.f32 %v778, 0.0
        %v842 = vmax.f32 %v781, 0.0
        %v843 = vmax.f32 %v784, 0.0
        %v844 = vmax.f32 %v787, 0.0
        %v845 = vmax.f32 %v790, 0.0
        %v846 = vmax.f32 %v793, 0.0
        %v847 = vmax.f32 %v796, 0.0
        %v848 = vmax.f32 %v799, 0.0
        %v849 = vmax.f32 %v802, 0.0
        %v850 = vmax.f32 %v805, 0.0
        %v851 = vmax.f32 %v808, 0.0
        %v852 = vmax.f32 %v811, 0.0
        %v853 = vmax.f32 %v814, 0.0
        %v854 = vmax.f32 %v817, 0.0
        %v855 = vmax.f32 %v820, 0.0
        %v856 = vmax.f32 %v823, 0.0
        %v857 = vmax.f32 %v826, 0.0
        %v858 = vmax.f32 %v829, 0.0
        %v859 = vmax.f32 %v832, 0.0
        %v860 = vmax.f32 %v835, 0.0
        %s861 = sld [smem:[#allocation2]]
        %v862 = vstv %s861
        %v863 = vmul.f32 %v837, %v862
        %v864 = vmul.f32 %v838, %v862
        %v865 = vmul.f32 %v839, %v862
        %v866 = vmul.f32 %v840, %v862
        %v867 = vmul.f32 %v841, %v862
        %v868 = vmul.f32 %v842, %v862
        %v869 = vmul.f32 %v843, %v862
        %v870 = vmul.f32 %v844, %v862
        %v871 = vmul.f32 %v845, %v862
        %v872 = vmul.f32 %v846, %v862
        %v873 = vmul.f32 %v847, %v862
        %v874 = vmul.f32 %v848, %v862
        %v875 = vmul.f32 %v849, %v862
        %v876 = vmul.f32 %v850, %v862
        %v877 = vmul.f32 %v851, %v862
        %v878 = vmul.f32 %v852, %v862
        %v879 = vmul.f32 %v853, %v862
        %v880 = vmul.f32 %v854, %v862
        %v881 = vmul.f32 %v855, %v862
        %v882 = vmul.f32 %v856, %v862
        %v883 = vmul.f32 %v857, %v862
        %v884 = vmul.f32 %v858, %v862
        %v885 = vmul.f32 %v859, %v862
        %v886 = vmul.f32 %v860, %v862
        %s887 = sld [smem:[#allocation2 + $0x1]]
        %v888 = vstv %s887
        %v889 = vadd.f32 %v863, %v888
        %v890 = vadd.f32 %v864, %v888
        %v891 = vadd.f32 %v865, %v888
        %v892 = vadd.f32 %v866, %v888
        %v893 = vadd.f32 %v867, %v888
        %v894 = vadd.f32 %v868, %v888
        %v895 = vadd.f32 %v869, %v888
        %v896 = vadd.f32 %v870, %v888
        %v897 = vadd.f32 %v871, %v888
        %v898 = vadd.f32 %v872, %v888
        %v899 = vadd.f32 %v873, %v888
        %v900 = vadd.f32 %v874, %v888
        %v901 = vadd.f32 %v875, %v888
        %v902 = vadd.f32 %v876, %v888
        %v903 = vadd.f32 %v877, %v888
        %v904 = vadd.f32 %v878, %v888
        %v905 = vadd.f32 %v879, %v888
        %v906 = vadd.f32 %v880, %v888
        %v907 = vadd.f32 %v881, %v888
        %v908 = vadd.f32 %v882, %v888
        %v909 = vadd.f32 %v883, %v888
        %v910 = vadd.f32 %v884, %v888
        %v911 = vadd.f32 %v885, %v888
        %v912 = vadd.f32 %v886, %v888
        %v913 = vmax.f32 %v889, 0.0
        %v914 = vmax.f32 %v890, 0.0
        %v915 = vmax.f32 %v891, 0.0
        %v916 = vmax.f32 %v892, 0.0
        %v917 = vmax.f32 %v893, 0.0
        %v918 = vmax.f32 %v894, 0.0
        %v919 = vmax.f32 %v895, 0.0
        %v920 = vmax.f32 %v896, 0.0
        %v921 = vmax.f32 %v897, 0.0
        %v922 = vmax.f32 %v898, 0.0
        %v923 = vmax.f32 %v899, 0.0
        %v924 = vmax.f32 %v900, 0.0
        %v925 = vmax.f32 %v901, 0.0
        %v926 = vmax.f32 %v902, 0.0
        %v927 = vmax.f32 %v903, 0.0
        %v928 = vmax.f32 %v904, 0.0
        %v929 = vmax.f32 %v905, 0.0
        %v930 = vmax.f32 %v906, 0.0
        %v931 = vmax.f32 %v907, 0.0
        %v932 = vmax.f32 %v908, 0.0
        %v933 = vmax.f32 %v909, 0.0
        %v934 = vmax.f32 %v910, 0.0
        %v935 = vmax.f32 %v911, 0.0
        %v936 = vmax.f32 %v912, 0.0
        %937 = vst.msk [vmem:[%s235] sm:$0xff] %vm617, %v913
        %938 = vst.msk [vmem:[%s235 + $0x8] sm:$0xff] %vm617, %v914
        %939 = vst.msk [vmem:[%s235 + $0x10] sm:$0xff] %vm617, %v915
        %940 = vst.msk [vmem:[%s235 + $0x18] sm:$0xff] %vm617, %v916
        %941 = vst.msk [vmem:[%s235 + $0x20] sm:$0xff] %vm617, %v917
        %942 = vst.msk [vmem:[%s235 + $0x28] sm:$0xff] %vm617, %v918
        %943 = vst.msk [vmem:[%s235 + $0x30] sm:$0xff] %vm617, %v919
        %944 = vst.msk [vmem:[%s235 + $0x38] sm:$0xff] %vm617, %v920
        %945 = vst.msk [vmem:[%s235 + $0x40] sm:$0xff] %vm617, %v921
        %946 = vst.msk [vmem:[%s235 + $0x48] sm:$0xff] %vm617, %v922
        %947 = vst.msk [vmem:[%s235 + $0x50] sm:$0xff] %vm617, %v923
        %948 = vst.msk [vmem:[%s235 + $0x58] sm:$0xff] %vm617, %v924
        %949 = vst.msk [vmem:[%s235 + $0x60] sm:$0xff] %vm617, %v925
        %950 = vst.msk [vmem:[%s235 + $0x68] sm:$0xff] %vm617, %v926
        %951 = vst.msk [vmem:[%s235 + $0x70] sm:$0xff] %vm617, %v927
        %952 = vst.msk [vmem:[%s235 + $0x78] sm:$0xff] %vm617, %v928
        %953 = vst.msk [vmem:[%s235 + $0x80] sm:$0xff] %vm617, %v929
        %954 = vst.msk [vmem:[%s235 + $0x88] sm:$0xff] %vm617, %v930
        %955 = vst.msk [vmem:[%s235 + $0x90] sm:$0xff] %vm617, %v931
        %956 = vst.msk [vmem:[%s235 + $0x98] sm:$0xff] %vm617, %v932
        %957 = vst.msk [vmem:[%s235 + $0xa0] sm:$0xff] %vm617, %v933
        %958 = vst.msk [vmem:[%s235 + $0xa8] sm:$0xff] %vm617, %v934
        %959 = vst.msk [vmem:[%s235 + $0xb0] sm:$0xff] %vm617, %v935
        %960 = vst.msk [vmem:[%s235 + $0xb8] sm:$0xff] %vm617, %v936
        %s961 = smul.u32 8, %s21
        %p962 = scmp.lt.s32.totalorder %s20, 1
        %s963 = scalar_select %p962, %s20, 1
        %p964 = scmp.lt.s32.totalorder %s961, 23
        %s965 = scalar_select %p964, %s961, 23
        %s966 = smul.addr %s965, 3
        %s967 = smul.addr %s963, 72
        %s968 = sadd.s32 %s966, %s967
        %s969 = smul.addr %s968, 8
        %s970 = scalar_lea.vmem %s4, %s969
        // Predicated region
        $region41: #{_decoder_img_forward.3} parent=35 // pred_check
          %p971 = pneg %p137
        $region42: #{_decoder_img_forward.3} parent=35 // pred_check_branch
          %973 = sbr.rel (%p971) target = $region44
        $region43: #{_decoder_img_forward.3} parent=35 // pred_region
          %s974 = smul.u32 8, %s21
        $region44: #{_decoder_img_forward.3} parent=35 // pred_fallthru
          _
      $region36: #{_decoder_img_forward.3} parent=5 // pred_fallthru
        _
      %p975 = scmp.le.s32.totalorder 2, %s11
      // Predicated region
      $region45: #{_decoder_img_forward.3} parent=5 // pred_check
        %p976 = pneg %p975
      $region46: #{_decoder_img_forward.3} parent=5 // pred_check_branch
        %978 = sbr.rel (%p976) target = $region48
      $region47: #{_decoder_img_forward.3} parent=5 // pred_region
        %s979 = ssub.s32 %s11, 2
        // Predicated region
        $region49: #{_decoder_img_forward.3} parent=47 // pred_check
          %p980 = pneg %p143
        $region50: #{_decoder_img_forward.3} parent=47 // pred_check_branch
          %982 = sbr.rel (%p980) target = $region52
        $region51: #{_decoder_img_forward.3} parent=47 // pred_region
          %s983 = smul.u32 8, %s23
          %p984 = scmp.lt.s32.totalorder %s22, 1
          %s985 = scalar_select %p984, %s22, 1
          %p986 = scmp.lt.s32.totalorder %s983, 23
          %s987 = scalar_select %p986, %s983, 23
          %s988 = smul.addr %s987, 3
          %s989 = smul.addr %s985, 72
          %s990 = sadd.s32 %s988, %s989
          %s991 = smul.addr %s990, 8
          %s992 = scalar_lea.vmem %s4, %s991
        $region52: #{_decoder_img_forward.3} parent=47 // pred_fallthru
          _
      $region48: #{_decoder_img_forward.3} parent=5 // pred_fallthru
        _
    $region6: #{_decoder_img_forward.3} parent=1 // loop_footer
      %s15 = sadd.s32 1, %s11
    $region7: #{_decoder_img_forward.3} parent=1 // loop_footer_branch
      %10 = sbr.rel target = $region3
    $region8: #{_decoder_img_forward.3} parent=1 // loop_exit
      _
    %993 = vsyncpa [#allocation3], 1
    %s994 = scalar_lea.sflag [#allocation3], 1
    %995 = vsyncpa %s994, 1

</llo_original>
